<compile_context>
chip_gen: v7x
topology: tpu7x:2x2x1
jax: 0.10.0
libtpu: 0.0.40
codegen_flags: <defaults>
</compile_context>

<pallas_src>
import jax
import jax.numpy as jnp
from jax.experimental import pallas as pl
from jax.experimental.pallas import tpu as pltpu


def lstm_mlp_kernel(x_ref, wih0_ref, wrec_ref, bias_ref,
                    w1_ref, b1_ref, w2_ref, b2_ref, w3_ref, b3_ref,
                    out_ref):
    T, B, I = x_ref.shape
    GP = wrec_ref.shape[0]          # 2*H (packed [layer0 | layer1] lane width)
    H = GP // 2

    bias = bias_ref[...]            # (1, 4*GP) f32 (both layers' gate biases)
    wrec = wrec_ref[...]            # (GP, 4*GP) bf16, fused recurrent block matrix

    # lane mask selecting the layer-0 half of the packed state (used at t=0 only)
    lane = jax.lax.broadcasted_iota(jnp.int32, (1, GP), 1)
    mask0 = (lane < H).astype(jnp.float32)

    def sigmoid1(v):
        # one EUP op (tanh) + VALU fixups; avoids exp + exact-divide lowering
        return 0.5 * jnp.tanh(0.5 * v) + 0.5

    # Per-step input projection recomputed inside the loop (VPU work, independent
    # of h -> hidden under MXU latency; avoids pinning 32 vregs of xgb).
    if I == 1:
        wih0_row = wih0_ref[...].astype(jnp.float32)       # (1, 4*GP)

        def pre_t(t):
            return x_ref[t] * wih0_row + bias              # (B, 4*GP)
    else:
        def pre_t(t):
            return jnp.dot(x_ref[t].astype(jnp.bfloat16), wih0_ref[...],
                           preferred_element_type=jnp.float32) + bias

    def cell(h, c, pre):
        # One fused bf16 matmul: layer-0 hh + layer-1 ih + layer-1 hh.
        g = jnp.dot(h.astype(jnp.bfloat16), wrec,
                    preferred_element_type=jnp.float32) + pre
        i = sigmoid1(g[:, 0 * GP:1 * GP])
        f = sigmoid1(g[:, 1 * GP:2 * GP])
        gg = jnp.tanh(g[:, 2 * GP:3 * GP])
        o = sigmoid1(g[:, 3 * GP:4 * GP])
        c_new = f * c + i * gg
        h_new = o * jnp.tanh(c_new)
        return h_new, c_new

    # ---- wavefront iteration 0: layer-0 step 0 only (h_{-1} = c_{-1} = 0) ----
    g = pre_t(0)
    i = sigmoid1(g[:, 0 * GP:1 * GP])
    gg = jnp.tanh(g[:, 2 * GP:3 * GP])
    o = sigmoid1(g[:, 3 * GP:4 * GP])
    c = (i * gg) * mask0            # keep the layer-1 half exactly zero
    h = o * jnp.tanh(c)             # layer-1 half: o * tanh(0) = 0

    # ---- wavefront iterations 1..T-1: layer-0 step t + layer-1 step t-1 ----
    for t in range(1, T):           # T is small & static: fully unrolled
        h, c = cell(h, c, pre_t(t))

    # ---- drain: layer-1 step T-1.  INVARIANT: the layer-0 half of h is junk
    # here and is cancelled only because rows 0:H of w1 are packed as zeros. ----
    h, c = cell(h, c, bias)

    # ---- MLP head (bf16 weights, f32 accumulation) ----
    z = jnp.dot(h.astype(jnp.bfloat16), w1_ref[...],
                preferred_element_type=jnp.float32) + b1_ref[...]
    z = jnp.maximum(z, 0.0)
    z = jnp.dot(z.astype(jnp.bfloat16), w2_ref[...],
                preferred_element_type=jnp.float32) + b2_ref[...]
    z = jnp.maximum(z, 0.0)
    # fc3: K=32, N=1 -> VPU multiply + lane reduce instead of an N=1 MXU matmul
    out_ref[...] = (jnp.sum(z * w3_ref[...].astype(jnp.float32),
                            axis=-1, keepdims=True) + b3_ref[...])


def lstm_model_forward(x, kparams):
    """x: (B, T, I) float32 (batch_first). Returns (B,) float32 == out.squeeze()."""
    B, T, I = x.shape
    B_pad = ((B + 7) // 8) * 8                               # full f32 sublane tiles
    x_tm = jnp.transpose(x, (1, 0, 2)).astype(jnp.float32)   # time-major (T, B, I)
    if B_pad != B:
        x_tm = jnp.pad(x_tm, ((0, 0), (0, B_pad - B), (0, 0)))

    in_arrays = (x_tm, kparams["wih0"], kparams["wrec"], kparams["bias"],
                 kparams["w1"], kparams["b1"], kparams["w2"], kparams["b2"],
                 kparams["w3"], kparams["b3"])

    nb = B_pad // 8                  # batch tiles; sharded across TCs on v7x
    in_specs = [pl.BlockSpec((T, 8, I), lambda b: (0, b, 0))]
    in_specs += [pl.BlockSpec(a.shape, lambda b: (0, 0)) for a in in_arrays[1:]]

    out = pl.pallas_call(
        lstm_mlp_kernel,
        out_shape=jax.ShapeDtypeStruct((B_pad, 1), jnp.float32),
        grid=(nb,),
        in_specs=in_specs,
        out_specs=pl.BlockSpec((8, 1), lambda b: (b, 0)),
        compiler_params=pltpu.CompilerParams(
            dimension_semantics=("parallel",)),
    )(*in_arrays)
    return jnp.squeeze(out[:B], axis=-1)


def init_params(key, input_size=1, hidden_size=64):
    """PyTorch-layout parameters (gate order i,f,g,o), deterministic init."""
    H, I = hidden_size, input_size
    ks = jax.random.split(key, 14)

    def u(k, shape, scale):
        return jax.random.uniform(k, shape, jnp.float32, -scale, scale)

    s = 1.0 / (H ** 0.5)
    return dict(
        w_ih_l0=u(ks[0], (4 * H, I), s), w_hh_l0=u(ks[1], (4 * H, H), s),
        b_ih_l0=u(ks[2], (4 * H,), s),   b_hh_l0=u(ks[3], (4 * H,), s),
        w_ih_l1=u(ks[4], (4 * H, H), s), w_hh_l1=u(ks[5], (4 * H, H), s),
        b_ih_l1=u(ks[6], (4 * H,), s),   b_hh_l1=u(ks[7], (4 * H,), s),
        fc1_w=u(ks[8], (64, H), 1.0 / (H ** 0.5)),  fc1_b=u(ks[9], (64,), 1.0 / (H ** 0.5)),
        fc2_w=u(ks[10], (32, 64), 1.0 / 8.0),       fc2_b=u(ks[11], (32,), 1.0 / 8.0),
        fc3_w=u(ks[12], (1, 32), 1.0 / (32 ** 0.5)), fc3_b=u(ks[13], (1,), 1.0 / (32 ** 0.5)),
    )


def pack_kernel_params(p, input_size=1, hidden_size=64):
    """Re-lay out PyTorch parameters for the fused wavefront kernel (bf16 weights)."""
    H, I = hidden_size, input_size
    GP = 2 * H                      # packed state width: [layer0 | layer1]

    def gate(w, k):                 # (4H, in) PyTorch layout -> (in, H) for gate k
        return w[k * H:(k + 1) * H, :].T

    wih0 = jnp.zeros((I, 4 * GP), jnp.float32)
    wrec = jnp.zeros((GP, 4 * GP), jnp.float32)
    bias = jnp.zeros((1, 4 * GP), jnp.float32)
    b0 = p["b_ih_l0"] + p["b_hh_l0"]
    b1 = p["b_ih_l1"] + p["b_hh_l1"]
    for k in range(4):              # gate order i, f, g, o
        c0, c1 = k * GP, k * GP + H                    # layer-0 / layer-1 cols of gate k
        wih0 = wih0.at[:, c0:c0 + H].set(gate(p["w_ih_l0"], k))
        wrec = wrec.at[0:H,  c0:c0 + H].set(gate(p["w_hh_l0"], k))   # layer-0 hh
        wrec = wrec.at[0:H,  c1:c1 + H].set(gate(p["w_ih_l1"], k))   # layer-1 ih (input = h0)
        wrec = wrec.at[H:GP, c1:c1 + H].set(gate(p["w_hh_l1"], k))   # layer-1 hh
        bias = bias.at[0, c0:c0 + H].set(b0[k * H:(k + 1) * H])
        bias = bias.at[0, c1:c1 + H].set(b1[k * H:(k + 1) * H])

    # MLP head padded to full 128-lane tiles.  NOTE: rows 0:H of w1 MUST stay
    # zero — they cancel the junk layer-0 half of h produced by the drain step.
    d1, d2 = p["fc1_w"].shape[0], p["fc2_w"].shape[0]
    w1 = jnp.zeros((GP, GP), jnp.float32).at[H:GP, 0:d1].set(p["fc1_w"].T)
    b1f = jnp.zeros((1, GP), jnp.float32).at[0, 0:d1].set(p["fc1_b"])
    w2 = jnp.zeros((GP, GP), jnp.float32).at[0:d1, 0:d2].set(p["fc2_w"].T)
    b2f = jnp.zeros((1, GP), jnp.float32).at[0, 0:d2].set(p["fc2_b"])
    w3 = jnp.zeros((1, GP), jnp.float32).at[0, 0:d2].set(p["fc3_w"][0])
    b3 = p["fc3_b"].reshape(1, 1)

    # Weights ship in bf16 (halves HBM->VMEM DMA, native MXU dtype); biases and
    # all recurrent state / elementwise math stay f32.
    return dict(wih0=wih0.astype(jnp.bfloat16),
                wrec=wrec.astype(jnp.bfloat16),
                bias=bias,
                w1=w1.astype(jnp.bfloat16), b1=b1f,
                w2=w2.astype(jnp.bfloat16), b2=b2f,
                w3=w3.astype(jnp.bfloat16), b3=b3)


def reference_forward(x, p):
    """Pure-JAX (f32) mirror of LSTMModel.forward in eval mode (dropout = identity)."""
    B, T, _ = x.shape
    H = p["w_hh_l0"].shape[1]
    h0 = c0 = h1 = c1 = jnp.zeros((B, H), jnp.float32)

    def cell(xin, h, c, w_ih, w_hh, b_ih, b_hh):
        g = xin @ w_ih.T + h @ w_hh.T + b_ih + b_hh
        i, f, gg, o = jnp.split(g, 4, axis=-1)
        i, f, o = jax.nn.sigmoid(i), jax.nn.sigmoid(f), jax.nn.sigmoid(o)
        gg = jnp.tanh(gg)
        c = f * c + i * gg
        return o * jnp.tanh(c), c

    for t in range(T):
        h0, c0 = cell(x[:, t, :], h0, c0, p["w_ih_l0"], p["w_hh_l0"],
                      p["b_ih_l0"], p["b_hh_l0"])
        h1, c1 = cell(h0, h1, c1, p["w_ih_l1"], p["w_hh_l1"],
                      p["b_ih_l1"], p["b_hh_l1"])
    z = jnp.maximum(h1 @ p["fc1_w"].T + p["fc1_b"], 0.0)
    z = jnp.maximum(z @ p["fc2_w"].T + p["fc2_b"], 0.0)
    z = z @ p["fc3_w"].T + p["fc3_b"]
    return jnp.squeeze(z)


if __name__ == "__main__":
    B, T, I, H = 2, 8, 1, 64
    key = jax.random.PRNGKey(0)
    kx, kp = jax.random.split(key)
    x = jax.random.normal(kx, (B, T, I), jnp.float32)       # batch_first input
    params = init_params(kp, input_size=I, hidden_size=H)
    kparams = pack_kernel_params(params, input_size=I, hidden_size=H)

    out = jax.block_until_ready(lstm_model_forward(x, kparams))
    ref = jax.block_until_ready(reference_forward(x, params))

    assert out.shape == (B,), out.shape
    # Tolerance accounts for bf16 MXU operands (f32 accumulation / f32 state).
    assert jnp.allclose(out, ref, atol=2e-2, rtol=2e-2), (out, ref)
    print("KERNEL_OK")
</pallas_src>

<mosaic_0001>
module attributes {stable_mosaic.version = 11 : i64} {
  func.func @lstm_mlp_kernel(%arg0: i32, %arg1: memref<8x8x1xf32, #tpu.memory_space<vmem>>, %arg2: memref<1x512xbf16, #tpu.memory_space<vmem>>, %arg3: memref<128x512xbf16, #tpu.memory_space<vmem>>, %arg4: memref<1x512xf32, #tpu.memory_space<vmem>>, %arg5: memref<128x128xbf16, #tpu.memory_space<vmem>>, %arg6: memref<1x128xf32, #tpu.memory_space<vmem>>, %arg7: memref<128x128xbf16, #tpu.memory_space<vmem>>, %arg8: memref<1x128xf32, #tpu.memory_space<vmem>>, %arg9: memref<1x128xbf16, #tpu.memory_space<vmem>>, %arg10: memref<1x1xf32, #tpu.memory_space<vmem>>, %arg11: memref<8x1xf32, #tpu.memory_space<vmem>>) attributes {dimension_semantics = [#tpu.dimension_semantics<parallel>], iteration_bounds = array<i64: 1>, scalar_prefetch = 0 : i64, scratch_operands = 0 : i64, tpu.core_type = #tpu.core_type<tc>, window_params = [{transform_indices = @transform_0, window_bounds = array<i64: 8, 8, 1>}, {pipeline_mode = #tpu.pipeline_mode<synchronous>, transform_indices = @transform_1, window_bounds = array<i64: 1, 512>}, {pipeline_mode = #tpu.pipeline_mode<synchronous>, transform_indices = @transform_2, window_bounds = array<i64: 128, 512>}, {pipeline_mode = #tpu.pipeline_mode<synchronous>, transform_indices = @transform_3, window_bounds = array<i64: 1, 512>}, {pipeline_mode = #tpu.pipeline_mode<synchronous>, transform_indices = @transform_4, window_bounds = array<i64: 128, 128>}, {pipeline_mode = #tpu.pipeline_mode<synchronous>, transform_indices = @transform_5, window_bounds = array<i64: 1, 128>}, {pipeline_mode = #tpu.pipeline_mode<synchronous>, transform_indices = @transform_6, window_bounds = array<i64: 128, 128>}, {pipeline_mode = #tpu.pipeline_mode<synchronous>, transform_indices = @transform_7, window_bounds = array<i64: 1, 128>}, {pipeline_mode = #tpu.pipeline_mode<synchronous>, transform_indices = @transform_8, window_bounds = array<i64: 1, 128>}, {pipeline_mode = #tpu.pipeline_mode<synchronous>, transform_indices = @transform_9, window_bounds = array<i64: 1, 1>}, {transform_indices = @transform_10, window_bounds = array<i64: 8, 1>}]} {
    %c0 = arith.constant 0 : index
    %c0_0 = arith.constant 0 : index
    %0 = vector.load %arg4[%c0, %c0_0] : memref<1x512xf32, #tpu.memory_space<vmem>>, vector<1x512xf32>
    %c0_1 = arith.constant 0 : index
    %c0_2 = arith.constant 0 : index
    %1 = vector.load %arg3[%c0_1, %c0_2] : memref<128x512xbf16, #tpu.memory_space<vmem>>, vector<128x512xbf16>
    %2 = tpu.iota {dimensions = array<i32: 1>} : vector<1x128xi32>
    %c64_i32 = arith.constant 64 : i32
    %3 = vector.broadcast %c64_i32 : i32 to vector<1x128xi32>
    %4 = arith.cmpi slt, %2, %3 : vector<1x128xi32>
    %5 = arith.extui %4 : vector<1x128xi1> to vector<1x128xi32>
    %6 = arith.sitofp %5 : vector<1x128xi32> to vector<1x128xf32>
    %c0_3 = arith.constant 0 : index
    %c0_4 = arith.constant 0 : index
    %7 = vector.load %arg2[%c0_3, %c0_4] : memref<1x512xbf16, #tpu.memory_space<vmem>>, vector<1x512xbf16>
    %8 = arith.extf %7 : vector<1x512xbf16> to vector<1x512xf32>
    %c0_5 = arith.constant 0 : index
    %c0_6 = arith.constant 0 : index
    %c0_7 = arith.constant 0 : index
    %9 = vector.load %arg1[%c0_5, %c0_6, %c0_7] : memref<8x8x1xf32, #tpu.memory_space<vmem>>, vector<1x8x1xf32>
    %10 = vector.shape_cast %9 : vector<1x8x1xf32> to vector<8x1xf32>
    %11 = vector.broadcast %10 : vector<8x1xf32> to vector<8x512xf32>
    %12 = vector.broadcast %8 : vector<1x512xf32> to vector<8x512xf32>
    %13 = arith.mulf %11, %12 : vector<8x512xf32>
    %14 = vector.broadcast %0 : vector<1x512xf32> to vector<8x512xf32>
    %15 = arith.addf %13, %14 : vector<8x512xf32>
    %16 = vector.extract_strided_slice %15 {offsets = [0, 0], sizes = [8, 128], strides = [1, 1]} : vector<8x512xf32> to vector<8x128xf32>
    %cst = arith.constant 5.000000e-01 : f32
    %17 = vector.broadcast %cst : f32 to vector<8x128xf32>
    %18 = arith.mulf %17, %16 : vector<8x128xf32>
    %19 = math.tanh %18 : vector<8x128xf32>
    %cst_8 = arith.constant 5.000000e-01 : f32
    %20 = vector.broadcast %cst_8 : f32 to vector<8x128xf32>
    %21 = arith.mulf %20, %19 : vector<8x128xf32>
    %cst_9 = arith.constant 5.000000e-01 : f32
    %22 = vector.broadcast %cst_9 : f32 to vector<8x128xf32>
    %23 = arith.addf %21, %22 : vector<8x128xf32>
    %24 = vector.extract_strided_slice %15 {offsets = [0, 256], sizes = [8, 128], strides = [1, 1]} : vector<8x512xf32> to vector<8x128xf32>
    %25 = math.tanh %24 : vector<8x128xf32>
    %26 = vector.extract_strided_slice %15 {offsets = [0, 384], sizes = [8, 128], strides = [1, 1]} : vector<8x512xf32> to vector<8x128xf32>
    %cst_10 = arith.constant 5.000000e-01 : f32
    %27 = vector.broadcast %cst_10 : f32 to vector<8x128xf32>
    %28 = arith.mulf %27, %26 : vector<8x128xf32>
    %29 = math.tanh %28 : vector<8x128xf32>
    %cst_11 = arith.constant 5.000000e-01 : f32
    %30 = vector.broadcast %cst_11 : f32 to vector<8x128xf32>
    %31 = arith.mulf %30, %29 : vector<8x128xf32>
    %cst_12 = arith.constant 5.000000e-01 : f32
    %32 = vector.broadcast %cst_12 : f32 to vector<8x128xf32>
    %33 = arith.addf %31, %32 : vector<8x128xf32>
    %34 = arith.mulf %23, %25 : vector<8x128xf32>
    %35 = vector.broadcast %6 : vector<1x128xf32> to vector<8x128xf32>
    %36 = arith.mulf %34, %35 : vector<8x128xf32>
    %37 = math.tanh %36 : vector<8x128xf32>
    %38 = arith.mulf %33, %37 : vector<8x128xf32>
    %c1 = arith.constant 1 : index
    %c0_13 = arith.constant 0 : index
    %c0_14 = arith.constant 0 : index
    %39 = vector.load %arg1[%c1, %c0_13, %c0_14] : memref<8x8x1xf32, #tpu.memory_space<vmem>>, vector<1x8x1xf32>
    %40 = vector.shape_cast %39 : vector<1x8x1xf32> to vector<8x1xf32>
    %41 = vector.broadcast %40 : vector<8x1xf32> to vector<8x512xf32>
    %42 = vector.broadcast %8 : vector<1x512xf32> to vector<8x512xf32>
    %43 = arith.mulf %41, %42 : vector<8x512xf32>
    %44 = vector.broadcast %0 : vector<1x512xf32> to vector<8x512xf32>
    %45 = arith.addf %43, %44 : vector<8x512xf32>
    %46 = arith.truncf %38 : vector<8x128xf32> to vector<8x128xbf16>
    %cst_15 = arith.constant dense<0.000000e+00> : vector<8x512xf32>
    %47 = tpu.matmul %46, %1, %cst_15 {dimension_numbers = #tpu.dot_dimension_numbers<[1], [0], [0], [1], [0, 0, 1, 1], [], []>} : vector<8x128xbf16>, vector<128x512xbf16>, vector<8x512xf32> -> vector<8x512xf32>
    %48 = arith.addf %47, %45 : vector<8x512xf32>
    %49 = vector.extract_strided_slice %48 {offsets = [0, 0], sizes = [8, 128], strides = [1, 1]} : vector<8x512xf32> to vector<8x128xf32>
    %cst_16 = arith.constant 5.000000e-01 : f32
    %50 = vector.broadcast %cst_16 : f32 to vector<8x128xf32>
    %51 = arith.mulf %50, %49 : vector<8x128xf32>
    %52 = math.tanh %51 : vector<8x128xf32>
    %cst_17 = arith.constant 5.000000e-01 : f32
    %53 = vector.broadcast %cst_17 : f32 to vector<8x128xf32>
    %54 = arith.mulf %53, %52 : vector<8x128xf32>
    %cst_18 = arith.constant 5.000000e-01 : f32
    %55 = vector.broadcast %cst_18 : f32 to vector<8x128xf32>
    %56 = arith.addf %54, %55 : vector<8x128xf32>
    %57 = vector.extract_strided_slice %48 {offsets = [0, 128], sizes = [8, 128], strides = [1, 1]} : vector<8x512xf32> to vector<8x128xf32>
    %cst_19 = arith.constant 5.000000e-01 : f32
    %58 = vector.broadcast %cst_19 : f32 to vector<8x128xf32>
    %59 = arith.mulf %58, %57 : vector<8x128xf32>
    %60 = math.tanh %59 : vector<8x128xf32>
    %cst_20 = arith.constant 5.000000e-01 : f32
    %61 = vector.broadcast %cst_20 : f32 to vector<8x128xf32>
    %62 = arith.mulf %61, %60 : vector<8x128xf32>
    %cst_21 = arith.constant 5.000000e-01 : f32
    %63 = vector.broadcast %cst_21 : f32 to vector<8x128xf32>
    %64 = arith.addf %62, %63 : vector<8x128xf32>
    %65 = vector.extract_strided_slice %48 {offsets = [0, 256], sizes = [8, 128], strides = [1, 1]} : vector<8x512xf32> to vector<8x128xf32>
    %66 = math.tanh %65 : vector<8x128xf32>
    %67 = vector.extract_strided_slice %48 {offsets = [0, 384], sizes = [8, 128], strides = [1, 1]} : vector<8x512xf32> to vector<8x128xf32>
    %cst_22 = arith.constant 5.000000e-01 : f32
    %68 = vector.broadcast %cst_22 : f32 to vector<8x128xf32>
    %69 = arith.mulf %68, %67 : vector<8x128xf32>
    %70 = math.tanh %69 : vector<8x128xf32>
    %cst_23 = arith.constant 5.000000e-01 : f32
    %71 = vector.broadcast %cst_23 : f32 to vector<8x128xf32>
    %72 = arith.mulf %71, %70 : vector<8x128xf32>
    %cst_24 = arith.constant 5.000000e-01 : f32
    %73 = vector.broadcast %cst_24 : f32 to vector<8x128xf32>
    %74 = arith.addf %72, %73 : vector<8x128xf32>
    %75 = arith.mulf %64, %36 : vector<8x128xf32>
    %76 = arith.mulf %56, %66 : vector<8x128xf32>
    %77 = arith.addf %75, %76 : vector<8x128xf32>
    %78 = math.tanh %77 : vector<8x128xf32>
    %79 = arith.mulf %74, %78 : vector<8x128xf32>
    %c2 = arith.constant 2 : index
    %c0_25 = arith.constant 0 : index
    %c0_26 = arith.constant 0 : index
    %80 = vector.load %arg1[%c2, %c0_25, %c0_26] : memref<8x8x1xf32, #tpu.memory_space<vmem>>, vector<1x8x1xf32>
    %81 = vector.shape_cast %80 : vector<1x8x1xf32> to vector<8x1xf32>
    %82 = vector.broadcast %81 : vector<8x1xf32> to vector<8x512xf32>
    %83 = vector.broadcast %8 : vector<1x512xf32> to vector<8x512xf32>
    %84 = arith.mulf %82, %83 : vector<8x512xf32>
    %85 = vector.broadcast %0 : vector<1x512xf32> to vector<8x512xf32>
    %86 = arith.addf %84, %85 : vector<8x512xf32>
    %87 = arith.truncf %79 : vector<8x128xf32> to vector<8x128xbf16>
    %cst_27 = arith.constant dense<0.000000e+00> : vector<8x512xf32>
    %88 = tpu.matmul %87, %1, %cst_27 {dimension_numbers = #tpu.dot_dimension_numbers<[1], [0], [0], [1], [0, 0, 1, 1], [], []>} : vector<8x128xbf16>, vector<128x512xbf16>, vector<8x512xf32> -> vector<8x512xf32>
    %89 = arith.addf %88, %86 : vector<8x512xf32>
    %90 = vector.extract_strided_slice %89 {offsets = [0, 0], sizes = [8, 128], strides = [1, 1]} : vector<8x512xf32> to vector<8x128xf32>
    %cst_28 = arith.constant 5.000000e-01 : f32
    %91 = vector.broadcast %cst_28 : f32 to vector<8x128xf32>
    %92 = arith.mulf %91, %90 : vector<8x128xf32>
    %93 = math.tanh %92 : vector<8x128xf32>
    %cst_29 = arith.constant 5.000000e-01 : f32
    %94 = vector.broadcast %cst_29 : f32 to vector<8x128xf32>
    %95 = arith.mulf %94, %93 : vector<8x128xf32>
    %cst_30 = arith.constant 5.000000e-01 : f32
    %96 = vector.broadcast %cst_30 : f32 to vector<8x128xf32>
    %97 = arith.addf %95, %96 : vector<8x128xf32>
    %98 = vector.extract_strided_slice %89 {offsets = [0, 128], sizes = [8, 128], strides = [1, 1]} : vector<8x512xf32> to vector<8x128xf32>
    %cst_31 = arith.constant 5.000000e-01 : f32
    %99 = vector.broadcast %cst_31 : f32 to vector<8x128xf32>
    %100 = arith.mulf %99, %98 : vector<8x128xf32>
    %101 = math.tanh %100 : vector<8x128xf32>
    %cst_32 = arith.constant 5.000000e-01 : f32
    %102 = vector.broadcast %cst_32 : f32 to vector<8x128xf32>
    %103 = arith.mulf %102, %101 : vector<8x128xf32>
    %cst_33 = arith.constant 5.000000e-01 : f32
    %104 = vector.broadcast %cst_33 : f32 to vector<8x128xf32>
    %105 = arith.addf %103, %104 : vector<8x128xf32>
    %106 = vector.extract_strided_slice %89 {offsets = [0, 256], sizes = [8, 128], strides = [1, 1]} : vector<8x512xf32> to vector<8x128xf32>
    %107 = math.tanh %106 : vector<8x128xf32>
    %108 = vector.extract_strided_slice %89 {offsets = [0, 384], sizes = [8, 128], strides = [1, 1]} : vector<8x512xf32> to vector<8x128xf32>
    %cst_34 = arith.constant 5.000000e-01 : f32
    %109 = vector.broadcast %cst_34 : f32 to vector<8x128xf32>
    %110 = arith.mulf %109, %108 : vector<8x128xf32>
    %111 = math.tanh %110 : vector<8x128xf32>
    %cst_35 = arith.constant 5.000000e-01 : f32
    %112 = vector.broadcast %cst_35 : f32 to vector<8x128xf32>
    %113 = arith.mulf %112, %111 : vector<8x128xf32>
    %cst_36 = arith.constant 5.000000e-01 : f32
    %114 = vector.broadcast %cst_36 : f32 to vector<8x128xf32>
    %115 = arith.addf %113, %114 : vector<8x128xf32>
    %116 = arith.mulf %105, %77 : vector<8x128xf32>
    %117 = arith.mulf %97, %107 : vector<8x128xf32>
    %118 = arith.addf %116, %117 : vector<8x128xf32>
    %119 = math.tanh %118 : vector<8x128xf32>
    %120 = arith.mulf %115, %119 : vector<8x128xf32>
    %c3 = arith.constant 3 : index
    %c0_37 = arith.constant 0 : index
    %c0_38 = arith.constant 0 : index
    %121 = vector.load %arg1[%c3, %c0_37, %c0_38] : memref<8x8x1xf32, #tpu.memory_space<vmem>>, vector<1x8x1xf32>
    %122 = vector.shape_cast %121 : vector<1x8x1xf32> to vector<8x1xf32>
    %123 = vector.broadcast %122 : vector<8x1xf32> to vector<8x512xf32>
    %124 = vector.broadcast %8 : vector<1x512xf32> to vector<8x512xf32>
    %125 = arith.mulf %123, %124 : vector<8x512xf32>
    %126 = vector.broadcast %0 : vector<1x512xf32> to vector<8x512xf32>
    %127 = arith.addf %125, %126 : vector<8x512xf32>
    %128 = arith.truncf %120 : vector<8x128xf32> to vector<8x128xbf16>
    %cst_39 = arith.constant dense<0.000000e+00> : vector<8x512xf32>
    %129 = tpu.matmul %128, %1, %cst_39 {dimension_numbers = #tpu.dot_dimension_numbers<[1], [0], [0], [1], [0, 0, 1, 1], [], []>} : vector<8x128xbf16>, vector<128x512xbf16>, vector<8x512xf32> -> vector<8x512xf32>
    %130 = arith.addf %129, %127 : vector<8x512xf32>
    %131 = vector.extract_strided_slice %130 {offsets = [0, 0], sizes = [8, 128], strides = [1, 1]} : vector<8x512xf32> to vector<8x128xf32>
    %cst_40 = arith.constant 5.000000e-01 : f32
    %132 = vector.broadcast %cst_40 : f32 to vector<8x128xf32>
    %133 = arith.mulf %132, %131 : vector<8x128xf32>
    %134 = math.tanh %133 : vector<8x128xf32>
    %cst_41 = arith.constant 5.000000e-01 : f32
    %135 = vector.broadcast %cst_41 : f32 to vector<8x128xf32>
    %136 = arith.mulf %135, %134 : vector<8x128xf32>
    %cst_42 = arith.constant 5.000000e-01 : f32
    %137 = vector.broadcast %cst_42 : f32 to vector<8x128xf32>
    %138 = arith.addf %136, %137 : vector<8x128xf32>
    %139 = vector.extract_strided_slice %130 {offsets = [0, 128], sizes = [8, 128], strides = [1, 1]} : vector<8x512xf32> to vector<8x128xf32>
    %cst_43 = arith.constant 5.000000e-01 : f32
    %140 = vector.broadcast %cst_43 : f32 to vector<8x128xf32>
    %141 = arith.mulf %140, %139 : vector<8x128xf32>
    %142 = math.tanh %141 : vector<8x128xf32>
    %cst_44 = arith.constant 5.000000e-01 : f32
    %143 = vector.broadcast %cst_44 : f32 to vector<8x128xf32>
    %144 = arith.mulf %143, %142 : vector<8x128xf32>
    %cst_45 = arith.constant 5.000000e-01 : f32
    %145 = vector.broadcast %cst_45 : f32 to vector<8x128xf32>
    %146 = arith.addf %144, %145 : vector<8x128xf32>
    %147 = vector.extract_strided_slice %130 {offsets = [0, 256], sizes = [8, 128], strides = [1, 1]} : vector<8x512xf32> to vector<8x128xf32>
    %148 = math.tanh %147 : vector<8x128xf32>
    %149 = vector.extract_strided_slice %130 {offsets = [0, 384], sizes = [8, 128], strides = [1, 1]} : vector<8x512xf32> to vector<8x128xf32>
    %cst_46 = arith.constant 5.000000e-01 : f32
    %150 = vector.broadcast %cst_46 : f32 to vector<8x128xf32>
    %151 = arith.mulf %150, %149 : vector<8x128xf32>
    %152 = math.tanh %151 : vector<8x128xf32>
    %cst_47 = arith.constant 5.000000e-01 : f32
    %153 = vector.broadcast %cst_47 : f32 to vector<8x128xf32>
    %154 = arith.mulf %153, %152 : vector<8x128xf32>
    %cst_48 = arith.constant 5.000000e-01 : f32
    %155 = vector.broadcast %cst_48 : f32 to vector<8x128xf32>
    %156 = arith.addf %154, %155 : vector<8x128xf32>
    %157 = arith.mulf %146, %118 : vector<8x128xf32>
    %158 = arith.mulf %138, %148 : vector<8x128xf32>
    %159 = arith.addf %157, %158 : vector<8x128xf32>
    %160 = math.tanh %159 : vector<8x128xf32>
    %161 = arith.mulf %156, %160 : vector<8x128xf32>
    %c4 = arith.constant 4 : index
    %c0_49 = arith.constant 0 : index
    %c0_50 = arith.constant 0 : index
    %162 = vector.load %arg1[%c4, %c0_49, %c0_50] : memref<8x8x1xf32, #tpu.memory_space<vmem>>, vector<1x8x1xf32>
    %163 = vector.shape_cast %162 : vector<1x8x1xf32> to vector<8x1xf32>
    %164 = vector.broadcast %163 : vector<8x1xf32> to vector<8x512xf32>
    %165 = vector.broadcast %8 : vector<1x512xf32> to vector<8x512xf32>
    %166 = arith.mulf %164, %165 : vector<8x512xf32>
    %167 = vector.broadcast %0 : vector<1x512xf32> to vector<8x512xf32>
    %168 = arith.addf %166, %167 : vector<8x512xf32>
    %169 = arith.truncf %161 : vector<8x128xf32> to vector<8x128xbf16>
    %cst_51 = arith.constant dense<0.000000e+00> : vector<8x512xf32>
    %170 = tpu.matmul %169, %1, %cst_51 {dimension_numbers = #tpu.dot_dimension_numbers<[1], [0], [0], [1], [0, 0, 1, 1], [], []>} : vector<8x128xbf16>, vector<128x512xbf16>, vector<8x512xf32> -> vector<8x512xf32>
    %171 = arith.addf %170, %168 : vector<8x512xf32>
    %172 = vector.extract_strided_slice %171 {offsets = [0, 0], sizes = [8, 128], strides = [1, 1]} : vector<8x512xf32> to vector<8x128xf32>
    %cst_52 = arith.constant 5.000000e-01 : f32
    %173 = vector.broadcast %cst_52 : f32 to vector<8x128xf32>
    %174 = arith.mulf %173, %172 : vector<8x128xf32>
    %175 = math.tanh %174 : vector<8x128xf32>
    %cst_53 = arith.constant 5.000000e-01 : f32
    %176 = vector.broadcast %cst_53 : f32 to vector<8x128xf32>
    %177 = arith.mulf %176, %175 : vector<8x128xf32>
    %cst_54 = arith.constant 5.000000e-01 : f32
    %178 = vector.broadcast %cst_54 : f32 to vector<8x128xf32>
    %179 = arith.addf %177, %178 : vector<8x128xf32>
    %180 = vector.extract_strided_slice %171 {offsets = [0, 128], sizes = [8, 128], strides = [1, 1]} : vector<8x512xf32> to vector<8x128xf32>
    %cst_55 = arith.constant 5.000000e-01 : f32
    %181 = vector.broadcast %cst_55 : f32 to vector<8x128xf32>
    %182 = arith.mulf %181, %180 : vector<8x128xf32>
    %183 = math.tanh %182 : vector<8x128xf32>
    %cst_56 = arith.constant 5.000000e-01 : f32
    %184 = vector.broadcast %cst_56 : f32 to vector<8x128xf32>
    %185 = arith.mulf %184, %183 : vector<8x128xf32>
    %cst_57 = arith.constant 5.000000e-01 : f32
    %186 = vector.broadcast %cst_57 : f32 to vector<8x128xf32>
    %187 = arith.addf %185, %186 : vector<8x128xf32>
    %188 = vector.extract_strided_slice %171 {offsets = [0, 256], sizes = [8, 128], strides = [1, 1]} : vector<8x512xf32> to vector<8x128xf32>
    %189 = math.tanh %188 : vector<8x128xf32>
    %190 = vector.extract_strided_slice %171 {offsets = [0, 384], sizes = [8, 128], strides = [1, 1]} : vector<8x512xf32> to vector<8x128xf32>
    %cst_58 = arith.constant 5.000000e-01 : f32
    %191 = vector.broadcast %cst_58 : f32 to vector<8x128xf32>
    %192 = arith.mulf %191, %190 : vector<8x128xf32>
    %193 = math.tanh %192 : vector<8x128xf32>
    %cst_59 = arith.constant 5.000000e-01 : f32
    %194 = vector.broadcast %cst_59 : f32 to vector<8x128xf32>
    %195 = arith.mulf %194, %193 : vector<8x128xf32>
    %cst_60 = arith.constant 5.000000e-01 : f32
    %196 = vector.broadcast %cst_60 : f32 to vector<8x128xf32>
    %197 = arith.addf %195, %196 : vector<8x128xf32>
    %198 = arith.mulf %187, %159 : vector<8x128xf32>
    %199 = arith.mulf %179, %189 : vector<8x128xf32>
    %200 = arith.addf %198, %199 : vector<8x128xf32>
    %201 = math.tanh %200 : vector<8x128xf32>
    %202 = arith.mulf %197, %201 : vector<8x128xf32>
    %c5 = arith.constant 5 : index
    %c0_61 = arith.constant 0 : index
    %c0_62 = arith.constant 0 : index
    %203 = vector.load %arg1[%c5, %c0_61, %c0_62] : memref<8x8x1xf32, #tpu.memory_space<vmem>>, vector<1x8x1xf32>
    %204 = vector.shape_cast %203 : vector<1x8x1xf32> to vector<8x1xf32>
    %205 = vector.broadcast %204 : vector<8x1xf32> to vector<8x512xf32>
    %206 = vector.broadcast %8 : vector<1x512xf32> to vector<8x512xf32>
    %207 = arith.mulf %205, %206 : vector<8x512xf32>
    %208 = vector.broadcast %0 : vector<1x512xf32> to vector<8x512xf32>
    %209 = arith.addf %207, %208 : vector<8x512xf32>
    %210 = arith.truncf %202 : vector<8x128xf32> to vector<8x128xbf16>
    %cst_63 = arith.constant dense<0.000000e+00> : vector<8x512xf32>
    %211 = tpu.matmul %210, %1, %cst_63 {dimension_numbers = #tpu.dot_dimension_numbers<[1], [0], [0], [1], [0, 0, 1, 1], [], []>} : vector<8x128xbf16>, vector<128x512xbf16>, vector<8x512xf32> -> vector<8x512xf32>
    %212 = arith.addf %211, %209 : vector<8x512xf32>
    %213 = vector.extract_strided_slice %212 {offsets = [0, 0], sizes = [8, 128], strides = [1, 1]} : vector<8x512xf32> to vector<8x128xf32>
    %cst_64 = arith.constant 5.000000e-01 : f32
    %214 = vector.broadcast %cst_64 : f32 to vector<8x128xf32>
    %215 = arith.mulf %214, %213 : vector<8x128xf32>
    %216 = math.tanh %215 : vector<8x128xf32>
    %cst_65 = arith.constant 5.000000e-01 : f32
    %217 = vector.broadcast %cst_65 : f32 to vector<8x128xf32>
    %218 = arith.mulf %217, %216 : vector<8x128xf32>
    %cst_66 = arith.constant 5.000000e-01 : f32
    %219 = vector.broadcast %cst_66 : f32 to vector<8x128xf32>
    %220 = arith.addf %218, %219 : vector<8x128xf32>
    %221 = vector.extract_strided_slice %212 {offsets = [0, 128], sizes = [8, 128], strides = [1, 1]} : vector<8x512xf32> to vector<8x128xf32>
    %cst_67 = arith.constant 5.000000e-01 : f32
    %222 = vector.broadcast %cst_67 : f32 to vector<8x128xf32>
    %223 = arith.mulf %222, %221 : vector<8x128xf32>
    %224 = math.tanh %223 : vector<8x128xf32>
    %cst_68 = arith.constant 5.000000e-01 : f32
    %225 = vector.broadcast %cst_68 : f32 to vector<8x128xf32>
    %226 = arith.mulf %225, %224 : vector<8x128xf32>
    %cst_69 = arith.constant 5.000000e-01 : f32
    %227 = vector.broadcast %cst_69 : f32 to vector<8x128xf32>
    %228 = arith.addf %226, %227 : vector<8x128xf32>
    %229 = vector.extract_strided_slice %212 {offsets = [0, 256], sizes = [8, 128], strides = [1, 1]} : vector<8x512xf32> to vector<8x128xf32>
    %230 = math.tanh %229 : vector<8x128xf32>
    %231 = vector.extract_strided_slice %212 {offsets = [0, 384], sizes = [8, 128], strides = [1, 1]} : vector<8x512xf32> to vector<8x128xf32>
    %cst_70 = arith.constant 5.000000e-01 : f32
    %232 = vector.broadcast %cst_70 : f32 to vector<8x128xf32>
    %233 = arith.mulf %232, %231 : vector<8x128xf32>
    %234 = math.tanh %233 : vector<8x128xf32>
    %cst_71 = arith.constant 5.000000e-01 : f32
    %235 = vector.broadcast %cst_71 : f32 to vector<8x128xf32>
    %236 = arith.mulf %235, %234 : vector<8x128xf32>
    %cst_72 = arith.constant 5.000000e-01 : f32
    %237 = vector.broadcast %cst_72 : f32 to vector<8x128xf32>
    %238 = arith.addf %236, %237 : vector<8x128xf32>
    %239 = arith.mulf %228, %200 : vector<8x128xf32>
    %240 = arith.mulf %220, %230 : vector<8x128xf32>
    %241 = arith.addf %239, %240 : vector<8x128xf32>
    %242 = math.tanh %241 : vector<8x128xf32>
    %243 = arith.mulf %238, %242 : vector<8x128xf32>
    %c6 = arith.constant 6 : index
    %c0_73 = arith.constant 0 : index
    %c0_74 = arith.constant 0 : index
    %244 = vector.load %arg1[%c6, %c0_73, %c0_74] : memref<8x8x1xf32, #tpu.memory_space<vmem>>, vector<1x8x1xf32>
    %245 = vector.shape_cast %244 : vector<1x8x1xf32> to vector<8x1xf32>
    %246 = vector.broadcast %245 : vector<8x1xf32> to vector<8x512xf32>
    %247 = vector.broadcast %8 : vector<1x512xf32> to vector<8x512xf32>
    %248 = arith.mulf %246, %247 : vector<8x512xf32>
    %249 = vector.broadcast %0 : vector<1x512xf32> to vector<8x512xf32>
    %250 = arith.addf %248, %249 : vector<8x512xf32>
    %251 = arith.truncf %243 : vector<8x128xf32> to vector<8x128xbf16>
    %cst_75 = arith.constant dense<0.000000e+00> : vector<8x512xf32>
    %252 = tpu.matmul %251, %1, %cst_75 {dimension_numbers = #tpu.dot_dimension_numbers<[1], [0], [0], [1], [0, 0, 1, 1], [], []>} : vector<8x128xbf16>, vector<128x512xbf16>, vector<8x512xf32> -> vector<8x512xf32>
    %253 = arith.addf %252, %250 : vector<8x512xf32>
    %254 = vector.extract_strided_slice %253 {offsets = [0, 0], sizes = [8, 128], strides = [1, 1]} : vector<8x512xf32> to vector<8x128xf32>
    %cst_76 = arith.constant 5.000000e-01 : f32
    %255 = vector.broadcast %cst_76 : f32 to vector<8x128xf32>
    %256 = arith.mulf %255, %254 : vector<8x128xf32>
    %257 = math.tanh %256 : vector<8x128xf32>
    %cst_77 = arith.constant 5.000000e-01 : f32
    %258 = vector.broadcast %cst_77 : f32 to vector<8x128xf32>
    %259 = arith.mulf %258, %257 : vector<8x128xf32>
    %cst_78 = arith.constant 5.000000e-01 : f32
    %260 = vector.broadcast %cst_78 : f32 to vector<8x128xf32>
    %261 = arith.addf %259, %260 : vector<8x128xf32>
    %262 = vector.extract_strided_slice %253 {offsets = [0, 128], sizes = [8, 128], strides = [1, 1]} : vector<8x512xf32> to vector<8x128xf32>
    %cst_79 = arith.constant 5.000000e-01 : f32
    %263 = vector.broadcast %cst_79 : f32 to vector<8x128xf32>
    %264 = arith.mulf %263, %262 : vector<8x128xf32>
    %265 = math.tanh %264 : vector<8x128xf32>
    %cst_80 = arith.constant 5.000000e-01 : f32
    %266 = vector.broadcast %cst_80 : f32 to vector<8x128xf32>
    %267 = arith.mulf %266, %265 : vector<8x128xf32>
    %cst_81 = arith.constant 5.000000e-01 : f32
    %268 = vector.broadcast %cst_81 : f32 to vector<8x128xf32>
    %269 = arith.addf %267, %268 : vector<8x128xf32>
    %270 = vector.extract_strided_slice %253 {offsets = [0, 256], sizes = [8, 128], strides = [1, 1]} : vector<8x512xf32> to vector<8x128xf32>
    %271 = math.tanh %270 : vector<8x128xf32>
    %272 = vector.extract_strided_slice %253 {offsets = [0, 384], sizes = [8, 128], strides = [1, 1]} : vector<8x512xf32> to vector<8x128xf32>
    %cst_82 = arith.constant 5.000000e-01 : f32
    %273 = vector.broadcast %cst_82 : f32 to vector<8x128xf32>
    %274 = arith.mulf %273, %272 : vector<8x128xf32>
    %275 = math.tanh %274 : vector<8x128xf32>
    %cst_83 = arith.constant 5.000000e-01 : f32
    %276 = vector.broadcast %cst_83 : f32 to vector<8x128xf32>
    %277 = arith.mulf %276, %275 : vector<8x128xf32>
    %cst_84 = arith.constant 5.000000e-01 : f32
    %278 = vector.broadcast %cst_84 : f32 to vector<8x128xf32>
    %279 = arith.addf %277, %278 : vector<8x128xf32>
    %280 = arith.mulf %269, %241 : vector<8x128xf32>
    %281 = arith.mulf %261, %271 : vector<8x128xf32>
    %282 = arith.addf %280, %281 : vector<8x128xf32>
    %283 = math.tanh %282 : vector<8x128xf32>
    %284 = arith.mulf %279, %283 : vector<8x128xf32>
    %c7 = arith.constant 7 : index
    %c0_85 = arith.constant 0 : index
    %c0_86 = arith.constant 0 : index
    %285 = vector.load %arg1[%c7, %c0_85, %c0_86] : memref<8x8x1xf32, #tpu.memory_space<vmem>>, vector<1x8x1xf32>
    %286 = vector.shape_cast %285 : vector<1x8x1xf32> to vector<8x1xf32>
    %287 = vector.broadcast %286 : vector<8x1xf32> to vector<8x512xf32>
    %288 = vector.broadcast %8 : vector<1x512xf32> to vector<8x512xf32>
    %289 = arith.mulf %287, %288 : vector<8x512xf32>
    %290 = vector.broadcast %0 : vector<1x512xf32> to vector<8x512xf32>
    %291 = arith.addf %289, %290 : vector<8x512xf32>
    %292 = arith.truncf %284 : vector<8x128xf32> to vector<8x128xbf16>
    %cst_87 = arith.constant dense<0.000000e+00> : vector<8x512xf32>
    %293 = tpu.matmul %292, %1, %cst_87 {dimension_numbers = #tpu.dot_dimension_numbers<[1], [0], [0], [1], [0, 0, 1, 1], [], []>} : vector<8x128xbf16>, vector<128x512xbf16>, vector<8x512xf32> -> vector<8x512xf32>
    %294 = arith.addf %293, %291 : vector<8x512xf32>
    %295 = vector.extract_strided_slice %294 {offsets = [0, 0], sizes = [8, 128], strides = [1, 1]} : vector<8x512xf32> to vector<8x128xf32>
    %cst_88 = arith.constant 5.000000e-01 : f32
    %296 = vector.broadcast %cst_88 : f32 to vector<8x128xf32>
    %297 = arith.mulf %296, %295 : vector<8x128xf32>
    %298 = math.tanh %297 : vector<8x128xf32>
    %cst_89 = arith.constant 5.000000e-01 : f32
    %299 = vector.broadcast %cst_89 : f32 to vector<8x128xf32>
    %300 = arith.mulf %299, %298 : vector<8x128xf32>
    %cst_90 = arith.constant 5.000000e-01 : f32
    %301 = vector.broadcast %cst_90 : f32 to vector<8x128xf32>
    %302 = arith.addf %300, %301 : vector<8x128xf32>
    %303 = vector.extract_strided_slice %294 {offsets = [0, 128], sizes = [8, 128], strides = [1, 1]} : vector<8x512xf32> to vector<8x128xf32>
    %cst_91 = arith.constant 5.000000e-01 : f32
    %304 = vector.broadcast %cst_91 : f32 to vector<8x128xf32>
    %305 = arith.mulf %304, %303 : vector<8x128xf32>
    %306 = math.tanh %305 : vector<8x128xf32>
    %cst_92 = arith.constant 5.000000e-01 : f32
    %307 = vector.broadcast %cst_92 : f32 to vector<8x128xf32>
    %308 = arith.mulf %307, %306 : vector<8x128xf32>
    %cst_93 = arith.constant 5.000000e-01 : f32
    %309 = vector.broadcast %cst_93 : f32 to vector<8x128xf32>
    %310 = arith.addf %308, %309 : vector<8x128xf32>
    %311 = vector.extract_strided_slice %294 {offsets = [0, 256], sizes = [8, 128], strides = [1, 1]} : vector<8x512xf32> to vector<8x128xf32>
    %312 = math.tanh %311 : vector<8x128xf32>
    %313 = vector.extract_strided_slice %294 {offsets = [0, 384], sizes = [8, 128], strides = [1, 1]} : vector<8x512xf32> to vector<8x128xf32>
    %cst_94 = arith.constant 5.000000e-01 : f32
    %314 = vector.broadcast %cst_94 : f32 to vector<8x128xf32>
    %315 = arith.mulf %314, %313 : vector<8x128xf32>
    %316 = math.tanh %315 : vector<8x128xf32>
    %cst_95 = arith.constant 5.000000e-01 : f32
    %317 = vector.broadcast %cst_95 : f32 to vector<8x128xf32>
    %318 = arith.mulf %317, %316 : vector<8x128xf32>
    %cst_96 = arith.constant 5.000000e-01 : f32
    %319 = vector.broadcast %cst_96 : f32 to vector<8x128xf32>
    %320 = arith.addf %318, %319 : vector<8x128xf32>
    %321 = arith.mulf %310, %282 : vector<8x128xf32>
    %322 = arith.mulf %302, %312 : vector<8x128xf32>
    %323 = arith.addf %321, %322 : vector<8x128xf32>
    %324 = math.tanh %323 : vector<8x128xf32>
    %325 = arith.mulf %320, %324 : vector<8x128xf32>
    %326 = arith.truncf %325 : vector<8x128xf32> to vector<8x128xbf16>
    %cst_97 = arith.constant dense<0.000000e+00> : vector<8x512xf32>
    %327 = tpu.matmul %326, %1, %cst_97 {dimension_numbers = #tpu.dot_dimension_numbers<[1], [0], [0], [1], [0, 0, 1, 1], [], []>} : vector<8x128xbf16>, vector<128x512xbf16>, vector<8x512xf32> -> vector<8x512xf32>
    %328 = vector.broadcast %0 : vector<1x512xf32> to vector<8x512xf32>
    %329 = arith.addf %327, %328 : vector<8x512xf32>
    %330 = vector.extract_strided_slice %329 {offsets = [0, 0], sizes = [8, 128], strides = [1, 1]} : vector<8x512xf32> to vector<8x128xf32>
    %cst_98 = arith.constant 5.000000e-01 : f32
    %331 = vector.broadcast %cst_98 : f32 to vector<8x128xf32>
    %332 = arith.mulf %331, %330 : vector<8x128xf32>
    %333 = math.tanh %332 : vector<8x128xf32>
    %cst_99 = arith.constant 5.000000e-01 : f32
    %334 = vector.broadcast %cst_99 : f32 to vector<8x128xf32>
    %335 = arith.mulf %334, %333 : vector<8x128xf32>
    %cst_100 = arith.constant 5.000000e-01 : f32
    %336 = vector.broadcast %cst_100 : f32 to vector<8x128xf32>
    %337 = arith.addf %335, %336 : vector<8x128xf32>
    %338 = vector.extract_strided_slice %329 {offsets = [0, 128], sizes = [8, 128], strides = [1, 1]} : vector<8x512xf32> to vector<8x128xf32>
    %cst_101 = arith.constant 5.000000e-01 : f32
    %339 = vector.broadcast %cst_101 : f32 to vector<8x128xf32>
    %340 = arith.mulf %339, %338 : vector<8x128xf32>
    %341 = math.tanh %340 : vector<8x128xf32>
    %cst_102 = arith.constant 5.000000e-01 : f32
    %342 = vector.broadcast %cst_102 : f32 to vector<8x128xf32>
    %343 = arith.mulf %342, %341 : vector<8x128xf32>
    %cst_103 = arith.constant 5.000000e-01 : f32
    %344 = vector.broadcast %cst_103 : f32 to vector<8x128xf32>
    %345 = arith.addf %343, %344 : vector<8x128xf32>
    %346 = vector.extract_strided_slice %329 {offsets = [0, 256], sizes = [8, 128], strides = [1, 1]} : vector<8x512xf32> to vector<8x128xf32>
    %347 = math.tanh %346 : vector<8x128xf32>
    %348 = vector.extract_strided_slice %329 {offsets = [0, 384], sizes = [8, 128], strides = [1, 1]} : vector<8x512xf32> to vector<8x128xf32>
    %cst_104 = arith.constant 5.000000e-01 : f32
    %349 = vector.broadcast %cst_104 : f32 to vector<8x128xf32>
    %350 = arith.mulf %349, %348 : vector<8x128xf32>
    %351 = math.tanh %350 : vector<8x128xf32>
    %cst_105 = arith.constant 5.000000e-01 : f32
    %352 = vector.broadcast %cst_105 : f32 to vector<8x128xf32>
    %353 = arith.mulf %352, %351 : vector<8x128xf32>
    %cst_106 = arith.constant 5.000000e-01 : f32
    %354 = vector.broadcast %cst_106 : f32 to vector<8x128xf32>
    %355 = arith.addf %353, %354 : vector<8x128xf32>
    %356 = arith.mulf %345, %323 : vector<8x128xf32>
    %357 = arith.mulf %337, %347 : vector<8x128xf32>
    %358 = arith.addf %356, %357 : vector<8x128xf32>
    %359 = math.tanh %358 : vector<8x128xf32>
    %360 = arith.mulf %355, %359 : vector<8x128xf32>
    %361 = arith.truncf %360 : vector<8x128xf32> to vector<8x128xbf16>
    %c0_107 = arith.constant 0 : index
    %c0_108 = arith.constant 0 : index
    %362 = vector.load %arg5[%c0_107, %c0_108] : memref<128x128xbf16, #tpu.memory_space<vmem>>, vector<128x128xbf16>
    %cst_109 = arith.constant dense<0.000000e+00> : vector<8x128xf32>
    %363 = tpu.matmul %361, %362, %cst_109 {dimension_numbers = #tpu.dot_dimension_numbers<[1], [0], [0], [1], [0, 0, 1, 1], [], []>} : vector<8x128xbf16>, vector<128x128xbf16>, vector<8x128xf32> -> vector<8x128xf32>
    %c0_110 = arith.constant 0 : index
    %c0_111 = arith.constant 0 : index
    %364 = vector.load %arg6[%c0_110, %c0_111] : memref<1x128xf32, #tpu.memory_space<vmem>>, vector<1x128xf32>
    %365 = vector.broadcast %364 : vector<1x128xf32> to vector<8x128xf32>
    %366 = arith.addf %363, %365 : vector<8x128xf32>
    %cst_112 = arith.constant 0.000000e+00 : f32
    %367 = vector.broadcast %cst_112 : f32 to vector<8x128xf32>
    %368 = arith.maximumf %366, %367 : vector<8x128xf32>
    %369 = arith.truncf %368 : vector<8x128xf32> to vector<8x128xbf16>
    %c0_113 = arith.constant 0 : index
    %c0_114 = arith.constant 0 : index
    %370 = vector.load %arg7[%c0_113, %c0_114] : memref<128x128xbf16, #tpu.memory_space<vmem>>, vector<128x128xbf16>
    %cst_115 = arith.constant dense<0.000000e+00> : vector<8x128xf32>
    %371 = tpu.matmul %369, %370, %cst_115 {dimension_numbers = #tpu.dot_dimension_numbers<[1], [0], [0], [1], [0, 0, 1, 1], [], []>} : vector<8x128xbf16>, vector<128x128xbf16>, vector<8x128xf32> -> vector<8x128xf32>
    %c0_116 = arith.constant 0 : index
    %c0_117 = arith.constant 0 : index
    %372 = vector.load %arg8[%c0_116, %c0_117] : memref<1x128xf32, #tpu.memory_space<vmem>>, vector<1x128xf32>
    %373 = vector.broadcast %372 : vector<1x128xf32> to vector<8x128xf32>
    %374 = arith.addf %371, %373 : vector<8x128xf32>
    %cst_118 = arith.constant 0.000000e+00 : f32
    %375 = vector.broadcast %cst_118 : f32 to vector<8x128xf32>
    %376 = arith.maximumf %374, %375 : vector<8x128xf32>
    %c0_119 = arith.constant 0 : index
    %c0_120 = arith.constant 0 : index
    %377 = vector.load %arg9[%c0_119, %c0_120] : memref<1x128xbf16, #tpu.memory_space<vmem>>, vector<1x128xbf16>
    %378 = arith.extf %377 : vector<1x128xbf16> to vector<1x128xf32>
    %379 = vector.broadcast %378 : vector<1x128xf32> to vector<8x128xf32>
    %380 = arith.mulf %376, %379 : vector<8x128xf32>
    %cst_121 = arith.constant dense<0.000000e+00> : vector<8xf32>
    %381 = vector.multi_reduction <add>, %380, %cst_121 [1] : vector<8x128xf32> to vector<8xf32>
    %382 = vector.shape_cast %381 : vector<8xf32> to vector<8x1xf32>
    %c0_122 = arith.constant 0 : index
    %c0_123 = arith.constant 0 : index
    %383 = vector.load %arg10[%c0_122, %c0_123] : memref<1x1xf32, #tpu.memory_space<vmem>>, vector<1x1xf32>
    %384 = vector.broadcast %383 : vector<1x1xf32> to vector<8x1xf32>
    %385 = arith.addf %382, %384 : vector<8x1xf32>
    %c0_124 = arith.constant 0 : index
    %c0_125 = arith.constant 0 : index
    %386 = vector.load %arg11[%c0_124, %c0_125] : memref<8x1xf32, #tpu.memory_space<vmem>>, vector<8x1xf32>
    tpu.vector_store %arg11[%c0_124, %c0_125], %385 {strides = array<i32>} : memref<8x1xf32, #tpu.memory_space<vmem>>, vector<8x1xf32>,
    return
  }
  func.func @transform_0(%arg0: i32) -> (i32, i32, i32) {
    %c0_i32 = arith.constant 0 : i32
    %c0_i32_0 = arith.constant 0 : i32
    %c0_i32_1 = arith.constant 0 : i32
    return %c0_i32, %arg0, %c0_i32_0 : i32, i32, i32
  }
  func.func @transform_1(%arg0: i32) -> (i32, i32) {
    %c0_i32 = arith.constant 0 : i32
    %c0_i32_0 = arith.constant 0 : i32
    %c0_i32_1 = arith.constant 0 : i32
    return %c0_i32, %c0_i32_0 : i32, i32
  }
  func.func @transform_2(%arg0: i32) -> (i32, i32) {
    %c0_i32 = arith.constant 0 : i32
    %c0_i32_0 = arith.constant 0 : i32
    %c0_i32_1 = arith.constant 0 : i32
    return %c0_i32, %c0_i32_0 : i32, i32
  }
  func.func @transform_3(%arg0: i32) -> (i32, i32) {
    %c0_i32 = arith.constant 0 : i32
    %c0_i32_0 = arith.constant 0 : i32
    %c0_i32_1 = arith.constant 0 : i32
    return %c0_i32, %c0_i32_0 : i32, i32
  }
  func.func @transform_4(%arg0: i32) -> (i32, i32) {
    %c0_i32 = arith.constant 0 : i32
    %c0_i32_0 = arith.constant 0 : i32
    %c0_i32_1 = arith.constant 0 : i32
    return %c0_i32, %c0_i32_0 : i32, i32
  }
  func.func @transform_5(%arg0: i32) -> (i32, i32) {
    %c0_i32 = arith.constant 0 : i32
    %c0_i32_0 = arith.constant 0 : i32
    %c0_i32_1 = arith.constant 0 : i32
    return %c0_i32, %c0_i32_0 : i32, i32
  }
  func.func @transform_6(%arg0: i32) -> (i32, i32) {
    %c0_i32 = arith.constant 0 : i32
    %c0_i32_0 = arith.constant 0 : i32
    %c0_i32_1 = arith.constant 0 : i32
    return %c0_i32, %c0_i32_0 : i32, i32
  }
  func.func @transform_7(%arg0: i32) -> (i32, i32) {
    %c0_i32 = arith.constant 0 : i32
    %c0_i32_0 = arith.constant 0 : i32
    %c0_i32_1 = arith.constant 0 : i32
    return %c0_i32, %c0_i32_0 : i32, i32
  }
  func.func @transform_8(%arg0: i32) -> (i32, i32) {
    %c0_i32 = arith.constant 0 : i32
    %c0_i32_0 = arith.constant 0 : i32
    %c0_i32_1 = arith.constant 0 : i32
    return %c0_i32, %c0_i32_0 : i32, i32
  }
  func.func @transform_9(%arg0: i32) -> (i32, i32) {
    %c0_i32 = arith.constant 0 : i32
    %c0_i32_0 = arith.constant 0 : i32
    %c0_i32_1 = arith.constant 0 : i32
    return %c0_i32, %c0_i32_0 : i32, i32
  }
  func.func @transform_10(%arg0: i32) -> (i32, i32) {
    %c0_i32 = arith.constant 0 : i32
    %c0_i32_0 = arith.constant 0 : i32
    return %arg0, %c0_i32 : i32, i32
  }
}

</mosaic_0001>

<llo_original>
// kernel: tpu_custom_call.1
$region0: #{tpu_custom_call.1}
  #allocation0 [shape = 'u32[]', space=smem, size = 0x4, offset = 0x4, fixed_abs, tag = 'smem constant byte address 0x4 - core index']
  #allocation1 [shape = 'u32[144,128]{1,0:T(1,128)}', space=vmem, size = 0x12000, scoped, tag = 'internal scratch']
  #allocation2 [shape = 'f32[1,1]{1,0:T(1,128)S(1)}', space=vmem, size = 0x200, scoped, tag = 'scoped memory for tpu_custom_call.1']
  %s0 = inlined_call_operand.vmem [shape: f32[8,8,1], index: 0, kind: input, shape index: {}]
  %s1 = inlined_call_operand.vmem [shape: bf16[1,512], index: 1, kind: input, shape index: {}]
  %s2 = inlined_call_operand.hbm [shape: bf16[128,512], index: 2, kind: input, shape index: {}]
  %s3 = inlined_call_operand.vmem [shape: f32[1,512], index: 3, kind: input, shape index: {}]
  %s4 = inlined_call_operand.vmem [shape: bf16[128,128], index: 4, kind: input, shape index: {}]
  %s5 = inlined_call_operand.vmem [shape: f32[1,128], index: 5, kind: input, shape index: {}]
  %s6 = inlined_call_operand.hbm [shape: bf16[128,128], index: 6, kind: input, shape index: {}]
  %s7 = inlined_call_operand.vmem [shape: f32[1,128], index: 7, kind: input, shape index: {}]
  %s8 = inlined_call_operand.vmem [shape: bf16[1,128], index: 8, kind: input, shape index: {}]
  %s9 = inlined_call_operand.<no memory space> [shape: f32[1,1], index: 9, kind: input, shape index: {}]
  %s10 = inlined_call_operand.vmem [shape: f32[8,1], index: 10, kind: output, shape index: {}]
  %s11 = sld [smem:[#allocation0]]
  $region58: #{tpu_custom_call.1} parent=0
    _
  %s13 = ssub.s32 1, %s11
  %s14 = scalar_select 0, %s13, %s11
  %v15 = vstv %s9
  %16 = vst [vmem:[#allocation2] sm:$0x1] %v15
  $region1: #{tpu_custom_call.1} parent=0
    #allocation3 [shape = 'u8[131072]{0}', space=vmem, size = 0x20000, scoped, tag = 'input window, operand 2, single buffered']
    #allocation4 [shape = 's32[1]{0}', space=sflag, size = 0x4, scoped, tag = 'scoped memory for tpu_custom_call.1']
    #allocation5 [shape = 'u8[32768]{0}', space=vmem, size = 0x8000, scoped, tag = 'input window, operand 6, single buffered']
    #allocation6 [shape = 's32[1]{0}', space=sflag, size = 0x4, scoped, tag = 'scoped memory for tpu_custom_call.1']
    %17 = vsyncpa [#allocation4], 0
    %18 = vsyncpa [#allocation6], 0
    // Predicated region
    $region2: #{tpu_custom_call.1} parent=1 // pred_check
      _
    $region3: #{tpu_custom_call.1} parent=1 // pred_check_branch
      %20 = sbr.rel (0) target = $region5
    $region4: #{tpu_custom_call.1} parent=1 // pred_region
      _
    $region5: #{tpu_custom_call.1} parent=1 // pred_fallthru
      _
    // Predicated region
    $region6: #{tpu_custom_call.1} parent=1 // pred_check
      _
    $region7: #{tpu_custom_call.1} parent=1 // pred_check_branch
      %22 = sbr.rel (0) target = $region9
    $region8: #{tpu_custom_call.1} parent=1 // pred_region
      _
    $region9: #{tpu_custom_call.1} parent=1 // pred_fallthru
      _
    // Predicated region
    $region10: #{tpu_custom_call.1} parent=1 // pred_check
      _
    $region11: #{tpu_custom_call.1} parent=1 // pred_check_branch
      %24 = sbr.rel (0) target = $region13
    $region12: #{tpu_custom_call.1} parent=1 // pred_region
      %s26 = ssub.s32 4096, 4096
      %27 = vsyncadd [#allocation4], %s26
      %s28 = sshll.u32 [#allocation3], 4
      %s29 = int_to_ptr.vmem [resolvable:$true] %s28
      %34 = dma.hbm_to_vmem [thread:$0]  %s2, 4096, %s29, [#allocation4], 256, 256, 16
    $region13: #{tpu_custom_call.1} parent=1 // pred_fallthru
      _
    // Predicated region
    $region14: #{tpu_custom_call.1} parent=1 // pred_check
      _
    $region15: #{tpu_custom_call.1} parent=1 // pred_check_branch
      %36 = sbr.rel (0) target = $region17
    $region16: #{tpu_custom_call.1} parent=1 // pred_region
      _
    $region17: #{tpu_custom_call.1} parent=1 // pred_fallthru
      _
    // Predicated region
    $region18: #{tpu_custom_call.1} parent=1 // pred_check
      _
    $region19: #{tpu_custom_call.1} parent=1 // pred_check_branch
      %38 = sbr.rel (0) target = $region21
    $region20: #{tpu_custom_call.1} parent=1 // pred_region
      _
    $region21: #{tpu_custom_call.1} parent=1 // pred_fallthru
      _
    // Predicated region
    $region22: #{tpu_custom_call.1} parent=1 // pred_check
      _
    $region23: #{tpu_custom_call.1} parent=1 // pred_check_branch
      %40 = sbr.rel (0) target = $region25
    $region24: #{tpu_custom_call.1} parent=1 // pred_region
      _
    $region25: #{tpu_custom_call.1} parent=1 // pred_fallthru
      _
    // Predicated region
    $region26: #{tpu_custom_call.1} parent=1 // pred_check
      _
    $region27: #{tpu_custom_call.1} parent=1 // pred_check_branch
      %42 = sbr.rel (0) target = $region29
    $region28: #{tpu_custom_call.1} parent=1 // pred_region
      %s44 = ssub.s32 1024, 1024
      %45 = vsyncadd [#allocation6], %s44
      %s46 = sshll.u32 [#allocation5], 4
      %s47 = int_to_ptr.vmem [resolvable:$true] %s46
      %52 = dma.hbm_to_vmem [thread:$0]  %s6, 1024, %s47, [#allocation6], 64, 64, 4
    $region29: #{tpu_custom_call.1} parent=1 // pred_fallthru
      _
    // Predicated region
    $region30: #{tpu_custom_call.1} parent=1 // pred_check
      _
    $region31: #{tpu_custom_call.1} parent=1 // pred_check_branch
      %54 = sbr.rel (0) target = $region33
    $region32: #{tpu_custom_call.1} parent=1 // pred_region
      _
    $region33: #{tpu_custom_call.1} parent=1 // pred_fallthru
      _
    // Predicated region
    $region34: #{tpu_custom_call.1} parent=1 // pred_check
      _
    $region35: #{tpu_custom_call.1} parent=1 // pred_check_branch
      %56 = sbr.rel (0) target = $region37
    $region36: #{tpu_custom_call.1} parent=1 // pred_region
      _
    $region37: #{tpu_custom_call.1} parent=1 // pred_fallthru
      _
    // Predicated region
    $region38: #{tpu_custom_call.1} parent=1 // pred_check
      _
    $region39: #{tpu_custom_call.1} parent=1 // pred_check_branch
      %58 = sbr.rel (0) target = $region41
    $region40: #{tpu_custom_call.1} parent=1 // pred_region
      _
    $region41: #{tpu_custom_call.1} parent=1 // pred_fallthru
      _
    // Predicated region
    $region42: #{tpu_custom_call.1} parent=1 // pred_check
      _
    $region43: #{tpu_custom_call.1} parent=1 // pred_check_branch
      %60 = sbr.rel (0) target = $region45
    $region44: #{tpu_custom_call.1} parent=1 // pred_region
      %61 = dma.done [#allocation4], 4096
    $region45: #{tpu_custom_call.1} parent=1 // pred_fallthru
      _
    // Predicated region
    $region46: #{tpu_custom_call.1} parent=1 // pred_check
      _
    $region47: #{tpu_custom_call.1} parent=1 // pred_check_branch
      %63 = sbr.rel (0) target = $region49
    $region48: #{tpu_custom_call.1} parent=1 // pred_region
      %64 = dma.done [#allocation6], 1024
    $region49: #{tpu_custom_call.1} parent=1 // pred_fallthru
      _
    %v66 = vld [vmem:[%s3] sm:$0xf]
    %v67 = vld [vmem:[#allocation3] sm:$0xff]
    %v68 = vld [vmem:[#allocation3 + $0x8] sm:$0xff]
    %v69 = vld [vmem:[#allocation3 + $0x10] sm:$0xff]
    %v70 = vld [vmem:[#allocation3 + $0x18] sm:$0xff]
    %v71 = vld [vmem:[#allocation3 + $0x20] sm:$0xff]
    %v72 = vld [vmem:[#allocation3 + $0x28] sm:$0xff]
    %v73 = vld [vmem:[#allocation3 + $0x30] sm:$0xff]
    %v74 = vld [vmem:[#allocation3 + $0x38] sm:$0xff]
    %v75 = vld [vmem:[#allocation3 + $0x40] sm:$0xff]
    %v76 = vld [vmem:[#allocation3 + $0x48] sm:$0xff]
    %v77 = vld [vmem:[#allocation3 + $0x50] sm:$0xff]
    %v78 = vld [vmem:[#allocation3 + $0x58] sm:$0xff]
    %v79 = vld [vmem:[#allocation3 + $0x60] sm:$0xff]
    %v80 = vld [vmem:[#allocation3 + $0x68] sm:$0xff]
    %v81 = vld [vmem:[#allocation3 + $0x70] sm:$0xff]
    %v82 = vld [vmem:[#allocation3 + $0x78] sm:$0xff]
    %v83 = vld [vmem:[#allocation3 + $0x80] sm:$0xff]
    %v84 = vld [vmem:[#allocation3 + $0x88] sm:$0xff]
    %v85 = vld [vmem:[#allocation3 + $0x90] sm:$0xff]
    %v86 = vld [vmem:[#allocation3 + $0x98] sm:$0xff]
    %v87 = vld [vmem:[#allocation3 + $0xa0] sm:$0xff]
    %v88 = vld [vmem:[#allocation3 + $0xa8] sm:$0xff]
    %v89 = vld [vmem:[#allocation3 + $0xb0] sm:$0xff]
    %v90 = vld [vmem:[#allocation3 + $0xb8] sm:$0xff]
    %v91 = vld [vmem:[#allocation3 + $0xc0] sm:$0xff]
    %v92 = vld [vmem:[#allocation3 + $0xc8] sm:$0xff]
    %v93 = vld [vmem:[#allocation3 + $0xd0] sm:$0xff]
    %v94 = vld [vmem:[#allocation3 + $0xd8] sm:$0xff]
    %v95 = vld [vmem:[#allocation3 + $0xe0] sm:$0xff]
    %v96 = vld [vmem:[#allocation3 + $0xe8] sm:$0xff]
    %v97 = vld [vmem:[#allocation3 + $0xf0] sm:$0xff]
    %v98 = vld [vmem:[#allocation3 + $0xf8] sm:$0xff]
    %v99 = vlaneseq
    %v100 = vand.u32 %v99, 127
    %vm101 = vcmp.lt.s32.totalorder %v100, 64
    %v102 = vsel %vm101, 1, 0
    %v103 = vcvt.s32.f32 %v102
    %v104 = vld [vmem:[%s1] sm:$0xf]
    %v105 = vunpack.c.l.bf16 %v104
    %v106 = vld [vmem:[%s0] sm:$0xff]
    %108 = vset.pattern.permute.xlu0 0
    %109 = vperm.xlu0 %108, %v106
    %v110 = vpop.permute.xlu0 %109
    %v113 = vlaneseq
    %v114 = vshrl.u32 %v113, 7
    %v115 = vsub.s32 0, %v114
    %v116 = vrot.slane %v105, %v115
    %v117 = vlaneseq
    %v118 = vshrl.u32 %v117, 7
    %v119 = vsub.s32 2, %v118
    %v120 = vrot.slane %v105, %v119
    %v121 = vlaneseq
    %v122 = vshrl.u32 %v121, 7
    %v123 = vsub.s32 4, %v122
    %v124 = vrot.slane %v105, %v123
    %v125 = vlaneseq
    %v126 = vshrl.u32 %v125, 7
    %v127 = vsub.s32 6, %v126
    %v128 = vrot.slane %v105, %v127
    %v133 = vlaneseq
    %v134 = vshrl.u32 %v133, 7
    %v135 = vsub.s32 0, %v134
    %v136 = vrot.slane %v116, %v135
    %v137 = vlaneseq
    %v138 = vshrl.u32 %v137, 7
    %v139 = vsub.s32 0, %v138
    %v140 = vrot.slane %v120, %v139
    %v141 = vlaneseq
    %v142 = vshrl.u32 %v141, 7
    %v143 = vsub.s32 0, %v142
    %v144 = vrot.slane %v124, %v143
    %v145 = vlaneseq
    %v146 = vshrl.u32 %v145, 7
    %v147 = vsub.s32 0, %v146
    %v148 = vrot.slane %v128, %v147
    %v149 = vmul.f32 %v110, %v136
    %v150 = vmul.f32 %v110, %v144
    %v151 = vmul.f32 %v110, %v148
    %v153 = vlaneseq
    %v154 = vshrl.u32 %v153, 7
    %v155 = vsub.s32 0, %v154
    %v156 = vrot.slane %v66, %v155
    %v157 = vlaneseq
    %v158 = vshrl.u32 %v157, 7
    %v159 = vsub.s32 1, %v158
    %v160 = vrot.slane %v66, %v159
    %v161 = vlaneseq
    %v162 = vshrl.u32 %v161, 7
    %v163 = vsub.s32 2, %v162
    %v164 = vrot.slane %v66, %v163
    %v165 = vlaneseq
    %v166 = vshrl.u32 %v165, 7
    %v167 = vsub.s32 3, %v166
    %v168 = vrot.slane %v66, %v167
    %v173 = vadd.f32 %v149, %v156
    %v174 = vadd.f32 %v150, %v164
    %v175 = vadd.f32 %v151, %v168
    %v176 = vmul.f32 %v173, 0.5
    %v177 = vtanh.pop %v176
    %v178 = vmul.f32 %v177, 0.5
    %v179 = vadd.f32 %v178, 0.5
    %v180 = vtanh.pop %v174
    %v181 = vmul.f32 %v175, 0.5
    %v182 = vtanh.pop %v181
    %v183 = vmul.f32 %v182, 0.5
    %v184 = vadd.f32 %v183, 0.5
    %v185 = vmul.f32 %v179, %v180
    %v186 = vmul.f32 %v185, %v103
    %v187 = vtanh.pop %v186
    %v188 = vmul.f32 %v184, %v187
    %s189 = scalar_lea.vmem %s0, 8
    %v190 = vld [vmem:[%s189] sm:$0xff]
    %192 = vset.pattern.permute.xlu0 0
    %193 = vperm.xlu0 %192, %v190
    %v194 = vpop.permute.xlu0 %193
    %v196 = vmul.f32 %v194, %v136
    %v197 = vmul.f32 %v194, %v140
    %v198 = vmul.f32 %v194, %v144
    %v199 = vmul.f32 %v194, %v148
    %v200 = vadd.f32 %v196, %v156
    %v201 = vadd.f32 %v197, %v160
    %v202 = vadd.f32 %v198, %v164
    %v203 = vadd.f32 %v199, %v168
    %v204 = vpack.c.bf16 %v188, %v188
    %v237 = vunpack.c.l.b16 %v67
    %v238 = vunpack.c.h.b16 %v67
    %v239 = vunpack.c.l.b16 %v68
    %v240 = vunpack.c.h.b16 %v68
    %v241 = vunpack.c.l.b16 %v69
    %v242 = vunpack.c.h.b16 %v69
    %v243 = vunpack.c.l.b16 %v70
    %v244 = vunpack.c.h.b16 %v70
    %v245 = vunpack.c.l.b16 %v71
    %v246 = vunpack.c.h.b16 %v71
    %v247 = vunpack.c.l.b16 %v72
    %v248 = vunpack.c.h.b16 %v72
    %v249 = vunpack.c.l.b16 %v73
    %v250 = vunpack.c.h.b16 %v73
    %v251 = vunpack.c.l.b16 %v74
    %v252 = vunpack.c.h.b16 %v74
    %v253 = vunpack.c.l.b16 %v75
    %v254 = vunpack.c.h.b16 %v75
    %v255 = vunpack.c.l.b16 %v76
    %v256 = vunpack.c.h.b16 %v76
    %v257 = vunpack.c.l.b16 %v77
    %v258 = vunpack.c.h.b16 %v77
    %v259 = vunpack.c.l.b16 %v78
    %v260 = vunpack.c.h.b16 %v78
    %v261 = vunpack.c.l.b16 %v79
    %v262 = vunpack.c.h.b16 %v79
    %v263 = vunpack.c.l.b16 %v80
    %v264 = vunpack.c.h.b16 %v80
    %v265 = vunpack.c.l.b16 %v81
    %v266 = vunpack.c.h.b16 %v81
    %v267 = vunpack.c.l.b16 %v82
    %v268 = vunpack.c.h.b16 %v82
    %v269 = vunpack.c.l.b16 %v83
    %v270 = vunpack.c.h.b16 %v83
    %v271 = vunpack.c.l.b16 %v84
    %v272 = vunpack.c.h.b16 %v84
    %v273 = vunpack.c.l.b16 %v85
    %v274 = vunpack.c.h.b16 %v85
    %v275 = vunpack.c.l.b16 %v86
    %v276 = vunpack.c.h.b16 %v86
    %v277 = vunpack.c.l.b16 %v87
    %v278 = vunpack.c.h.b16 %v87
    %v279 = vunpack.c.l.b16 %v88
    %v280 = vunpack.c.h.b16 %v88
    %v281 = vunpack.c.l.b16 %v89
    %v282 = vunpack.c.h.b16 %v89
    %v283 = vunpack.c.l.b16 %v90
    %v284 = vunpack.c.h.b16 %v90
    %v285 = vunpack.c.l.b16 %v91
    %v286 = vunpack.c.h.b16 %v91
    %v287 = vunpack.c.l.b16 %v92
    %v288 = vunpack.c.h.b16 %v92
    %v289 = vunpack.c.l.b16 %v93
    %v290 = vunpack.c.h.b16 %v93
    %v291 = vunpack.c.l.b16 %v94
    %v292 = vunpack.c.h.b16 %v94
    %v293 = vunpack.c.l.b16 %v95
    %v294 = vunpack.c.h.b16 %v95
    %v295 = vunpack.c.l.b16 %v96
    %v296 = vunpack.c.h.b16 %v96
    %v297 = vunpack.c.l.b16 %v97
    %v298 = vunpack.c.h.b16 %v97
    %v299 = vunpack.c.l.b16 %v98
    %v300 = vunpack.c.h.b16 %v98
    %v301 = vpack.c.b16 %v241, %v237
    %v302 = vpack.c.b16 %v242, %v238
    %v303 = vpack.c.b16 %v243, %v239
    %v304 = vpack.c.b16 %v244, %v240
    %v305 = vpack.c.b16 %v249, %v245
    %v306 = vpack.c.b16 %v250, %v246
    %v307 = vpack.c.b16 %v251, %v247
    %v308 = vpack.c.b16 %v252, %v248
    %v309 = vpack.c.b16 %v257, %v253
    %v310 = vpack.c.b16 %v258, %v254
    %v311 = vpack.c.b16 %v259, %v255
    %v312 = vpack.c.b16 %v260, %v256
    %v313 = vpack.c.b16 %v265, %v261
    %v314 = vpack.c.b16 %v266, %v262
    %v315 = vpack.c.b16 %v267, %v263
    %v316 = vpack.c.b16 %v268, %v264
    %v317 = vpack.c.b16 %v273, %v269
    %v318 = vpack.c.b16 %v274, %v270
    %v319 = vpack.c.b16 %v275, %v271
    %v320 = vpack.c.b16 %v276, %v272
    %v321 = vpack.c.b16 %v281, %v277
    %v322 = vpack.c.b16 %v282, %v278
    %v323 = vpack.c.b16 %v283, %v279
    %v324 = vpack.c.b16 %v284, %v280
    %v325 = vpack.c.b16 %v289, %v285
    %v326 = vpack.c.b16 %v290, %v286
    %v327 = vpack.c.b16 %v291, %v287
    %v328 = vpack.c.b16 %v292, %v288
    %v329 = vpack.c.b16 %v297, %v293
    %v330 = vpack.c.b16 %v298, %v294
    %v331 = vpack.c.b16 %v299, %v295
    %v332 = vpack.c.b16 %v300, %v296
    %365 = vmatprep.subr.bf16.mxu0 %v302
    %366 = vmatpush1.bf16.msra.mxu0 %v301
    %367 = vmatprep.subr.bf16.mxu0 %v306
    %368 = vmatpush1.bf16.msra.mxu0 %v305
    %369 = vmatprep.subr.bf16.mxu0 %v310
    %370 = vmatpush1.bf16.msra.mxu0 %v309
    %371 = vmatprep.subr.bf16.mxu0 %v314
    %372 = vmatpush1.bf16.msra.mxu0 %v313
    %373 = vmatprep.subr.bf16.mxu0 %v318
    %374 = vmatpush1.bf16.msra.mxu0 %v317
    %375 = vmatprep.subr.bf16.mxu0 %v322
    %376 = vmatpush1.bf16.msra.mxu0 %v321
    %377 = vmatprep.subr.bf16.mxu0 %v326
    %378 = vmatpush1.bf16.msra.mxu0 %v325
    %379 = vmatprep.subr.bf16.mxu0 %v330
    %380 = vmatpush1.bf16.msra.mxu0 %v329
    %381 = vmatprep.subr.bf16.mxu0 0
    %382 = vmatpush1.bf16.msra.mxu0 0
    %383 = vmatprep.subr.bf16.mxu0 0
    %384 = vmatpush1.bf16.msra.mxu0 0
    %385 = vmatprep.subr.bf16.mxu0 0
    %386 = vmatpush1.bf16.msra.mxu0 0
    %387 = vmatprep.subr.bf16.mxu0 0
    %388 = vmatpush1.bf16.msra.mxu0 0
    %389 = vmatprep.subr.bf16.mxu0 0
    %390 = vmatpush1.bf16.msra.mxu0 0
    %391 = vmatprep.subr.bf16.mxu0 0
    %392 = vmatpush1.bf16.msra.mxu0 0
    %393 = vmatprep.subr.bf16.mxu0 0
    %394 = vmatpush1.bf16.msra.mxu0 0
    %395 = vmatprep.subr.bf16.mxu0 0
    %396 = vmatpush1.bf16.msra.mxu0 0
    %397 = vmatprep.mubr.bf16.mxu0 0
    %398 = vmatmul.mubr.bf16.gmra.mrb[0].mxu0 %v204
    %v399 = vpop.f32.mrb[0].mxu0
    %v400 = vadd.f32 %v200, %v399
    %v401 = vpop.f32.mrb[0].mxu0
    %v402 = vadd.f32 %v201, %v401
    %v403 = vpop.f32.mrb[0].mxu0
    %v404 = vpop.f32.mrb[0].mxu0
    %405 = vdwg.mxu0
    %406 = vmatprep.subr.bf16.mxu0 %v304
    %407 = vmatpush1.bf16.msra.mxu0 %v303
    %408 = vmatprep.subr.bf16.mxu0 %v308
    %409 = vmatpush1.bf16.msra.mxu0 %v307
    %410 = vmatprep.subr.bf16.mxu0 %v312
    %411 = vmatpush1.bf16.msra.mxu0 %v311
    %412 = vmatprep.subr.bf16.mxu0 %v316
    %413 = vmatpush1.bf16.msra.mxu0 %v315
    %414 = vmatprep.subr.bf16.mxu0 %v320
    %415 = vmatpush1.bf16.msra.mxu0 %v319
    %416 = vmatprep.subr.bf16.mxu0 %v324
    %417 = vmatpush1.bf16.msra.mxu0 %v323
    %418 = vmatprep.subr.bf16.mxu0 %v328
    %419 = vmatpush1.bf16.msra.mxu0 %v327
    %420 = vmatprep.subr.bf16.mxu0 %v332
    %421 = vmatpush1.bf16.msra.mxu0 %v331
    %422 = vmatprep.subr.bf16.mxu0 0
    %423 = vmatpush1.bf16.msra.mxu0 0
    %424 = vmatprep.subr.bf16.mxu0 0
    %425 = vmatpush1.bf16.msra.mxu0 0
    %426 = vmatprep.subr.bf16.mxu0 0
    %427 = vmatpush1.bf16.msra.mxu0 0
    %428 = vmatprep.subr.bf16.mxu0 0
    %429 = vmatpush1.bf16.msra.mxu0 0
    %430 = vmatprep.subr.bf16.mxu0 0
    %431 = vmatpush1.bf16.msra.mxu0 0
    %432 = vmatprep.subr.bf16.mxu0 0
    %433 = vmatpush1.bf16.msra.mxu0 0
    %434 = vmatprep.subr.bf16.mxu0 0
    %435 = vmatpush1.bf16.msra.mxu0 0
    %436 = vmatprep.subr.bf16.mxu0 0
    %437 = vmatpush1.bf16.msra.mxu0 0
    %438 = vmatprep.mubr.bf16.mxu0 0
    %439 = vmatmul.mubr.bf16.gmra.mrb[0].mxu0 %v204
    %v440 = vpop.f32.mrb[0].mxu0
    %v441 = vadd.f32 %v202, %v440
    %v442 = vpop.f32.mrb[0].mxu0
    %v443 = vadd.f32 %v203, %v442
    %v444 = vpop.f32.mrb[0].mxu0
    %v445 = vpop.f32.mrb[0].mxu0
    %446 = vdwg.mxu0
    %v447 = vmul.f32 %v400, 0.5
    %v448 = vtanh.pop %v447
    %v449 = vmul.f32 %v448, 0.5
    %v450 = vadd.f32 %v449, 0.5
    %v451 = vmul.f32 %v402, 0.5
    %v452 = vtanh.pop %v451
    %v453 = vmul.f32 %v452, 0.5
    %v454 = vadd.f32 %v453, 0.5
    %v455 = vtanh.pop %v441
    %v456 = vmul.f32 %v443, 0.5
    %v457 = vtanh.pop %v456
    %v458 = vmul.f32 %v457, 0.5
    %v459 = vadd.f32 %v458, 0.5
    %v460 = vmul.f32 %v454, %v186
    %v461 = vmul.f32 %v450, %v455
    %v462 = vadd.f32 %v460, %v461
    %v463 = vtanh.pop %v462
    %v464 = vmul.f32 %v459, %v463
    %s465 = scalar_lea.vmem %s0, 16
    %v466 = vld [vmem:[%s465] sm:$0xff]
    %468 = vset.pattern.permute.xlu0 0
    %469 = vperm.xlu0 %468, %v466
    %v470 = vpop.permute.xlu0 %469
    %v472 = vmul.f32 %v470, %v136
    %v473 = vmul.f32 %v470, %v140
    %v474 = vmul.f32 %v470, %v144
    %v475 = vmul.f32 %v470, %v148
    %v476 = vadd.f32 %v472, %v156
    %v477 = vadd.f32 %v473, %v160
    %v478 = vadd.f32 %v474, %v164
    %v479 = vadd.f32 %v475, %v168
    %v480 = vpack.c.bf16 %v464, %v464
    %481 = vmatprep.subr.bf16.mxu0 %v302
    %482 = vmatpush1.bf16.msra.mxu0 %v301
    %483 = vmatprep.subr.bf16.mxu0 %v306
    %484 = vmatpush1.bf16.msra.mxu0 %v305
    %485 = vmatprep.subr.bf16.mxu0 %v310
    %486 = vmatpush1.bf16.msra.mxu0 %v309
    %487 = vmatprep.subr.bf16.mxu0 %v314
    %488 = vmatpush1.bf16.msra.mxu0 %v313
    %489 = vmatprep.subr.bf16.mxu0 %v318
    %490 = vmatpush1.bf16.msra.mxu0 %v317
    %491 = vmatprep.subr.bf16.mxu0 %v322
    %492 = vmatpush1.bf16.msra.mxu0 %v321
    %493 = vmatprep.subr.bf16.mxu0 %v326
    %494 = vmatpush1.bf16.msra.mxu0 %v325
    %495 = vmatprep.subr.bf16.mxu0 %v330
    %496 = vmatpush1.bf16.msra.mxu0 %v329
    %497 = vmatprep.subr.bf16.mxu0 0
    %498 = vmatpush1.bf16.msra.mxu0 0
    %499 = vmatprep.subr.bf16.mxu0 0
    %500 = vmatpush1.bf16.msra.mxu0 0
    %501 = vmatprep.subr.bf16.mxu0 0
    %502 = vmatpush1.bf16.msra.mxu0 0
    %503 = vmatprep.subr.bf16.mxu0 0
    %504 = vmatpush1.bf16.msra.mxu0 0
    %505 = vmatprep.subr.bf16.mxu0 0
    %506 = vmatpush1.bf16.msra.mxu0 0
    %507 = vmatprep.subr.bf16.mxu0 0
    %508 = vmatpush1.bf16.msra.mxu0 0
    %509 = vmatprep.subr.bf16.mxu0 0
    %510 = vmatpush1.bf16.msra.mxu0 0
    %511 = vmatprep.subr.bf16.mxu0 0
    %512 = vmatpush1.bf16.msra.mxu0 0
    %513 = vmatprep.mubr.bf16.mxu0 0
    %514 = vmatmul.mubr.bf16.gmra.mrb[0].mxu0 %v480
    %v515 = vpop.f32.mrb[0].mxu0
    %v516 = vadd.f32 %v476, %v515
    %v517 = vpop.f32.mrb[0].mxu0
    %v518 = vadd.f32 %v477, %v517
    %v519 = vpop.f32.mrb[0].mxu0
    %v520 = vpop.f32.mrb[0].mxu0
    %521 = vdwg.mxu0
    %522 = vmatprep.subr.bf16.mxu0 %v304
    %523 = vmatpush1.bf16.msra.mxu0 %v303
    %524 = vmatprep.subr.bf16.mxu0 %v308
    %525 = vmatpush1.bf16.msra.mxu0 %v307
    %526 = vmatprep.subr.bf16.mxu0 %v312
    %527 = vmatpush1.bf16.msra.mxu0 %v311
    %528 = vmatprep.subr.bf16.mxu0 %v316
    %529 = vmatpush1.bf16.msra.mxu0 %v315
    %530 = vmatprep.subr.bf16.mxu0 %v320
    %531 = vmatpush1.bf16.msra.mxu0 %v319
    %532 = vmatprep.subr.bf16.mxu0 %v324
    %533 = vmatpush1.bf16.msra.mxu0 %v323
    %534 = vmatprep.subr.bf16.mxu0 %v328
    %535 = vmatpush1.bf16.msra.mxu0 %v327
    %536 = vmatprep.subr.bf16.mxu0 %v332
    %537 = vmatpush1.bf16.msra.mxu0 %v331
    %538 = vmatprep.subr.bf16.mxu0 0
    %539 = vmatpush1.bf16.msra.mxu0 0
    %540 = vmatprep.subr.bf16.mxu0 0
    %541 = vmatpush1.bf16.msra.mxu0 0
    %542 = vmatprep.subr.bf16.mxu0 0
    %543 = vmatpush1.bf16.msra.mxu0 0
    %544 = vmatprep.subr.bf16.mxu0 0
    %545 = vmatpush1.bf16.msra.mxu0 0
    %546 = vmatprep.subr.bf16.mxu0 0
    %547 = vmatpush1.bf16.msra.mxu0 0
    %548 = vmatprep.subr.bf16.mxu0 0
    %549 = vmatpush1.bf16.msra.mxu0 0
    %550 = vmatprep.subr.bf16.mxu0 0
    %551 = vmatpush1.bf16.msra.mxu0 0
    %552 = vmatprep.subr.bf16.mxu0 0
    %553 = vmatpush1.bf16.msra.mxu0 0
    %554 = vmatprep.mubr.bf16.mxu0 0
    %555 = vmatmul.mubr.bf16.gmra.mrb[0].mxu0 %v480
    %v556 = vpop.f32.mrb[0].mxu0
    %v557 = vadd.f32 %v478, %v556
    %v558 = vpop.f32.mrb[0].mxu0
    %v559 = vadd.f32 %v479, %v558
    %v560 = vpop.f32.mrb[0].mxu0
    %v561 = vpop.f32.mrb[0].mxu0
    %562 = vdwg.mxu0
    %v563 = vmul.f32 %v516, 0.5
    %v564 = vtanh.pop %v563
    %v565 = vmul.f32 %v564, 0.5
    %v566 = vadd.f32 %v565, 0.5
    %v567 = vmul.f32 %v518, 0.5
    %v568 = vtanh.pop %v567
    %v569 = vmul.f32 %v568, 0.5
    %v570 = vadd.f32 %v569, 0.5
    %v571 = vtanh.pop %v557
    %v572 = vmul.f32 %v559, 0.5
    %v573 = vtanh.pop %v572
    %v574 = vmul.f32 %v573, 0.5
    %v575 = vadd.f32 %v574, 0.5
    %v576 = vmul.f32 %v570, %v462
    %v577 = vmul.f32 %v566, %v571
    %v578 = vadd.f32 %v576, %v577
    %v579 = vtanh.pop %v578
    %v580 = vmul.f32 %v575, %v579
    %s581 = scalar_lea.vmem %s0, 24
    %v582 = vld [vmem:[%s581] sm:$0xff]
    %584 = vset.pattern.permute.xlu0 0
    %585 = vperm.xlu0 %584, %v582
    %v586 = vpop.permute.xlu0 %585
    %v588 = vmul.f32 %v586, %v136
    %v589 = vmul.f32 %v586, %v140
    %v590 = vmul.f32 %v586, %v144
    %v591 = vmul.f32 %v586, %v148
    %v592 = vadd.f32 %v588, %v156
    %v593 = vadd.f32 %v589, %v160
    %v594 = vadd.f32 %v590, %v164
    %v595 = vadd.f32 %v591, %v168
    %v596 = vpack.c.bf16 %v580, %v580
    %597 = vmatprep.subr.bf16.mxu0 %v302
    %598 = vmatpush1.bf16.msra.mxu0 %v301
    %599 = vmatprep.subr.bf16.mxu0 %v306
    %600 = vmatpush1.bf16.msra.mxu0 %v305
    %601 = vmatprep.subr.bf16.mxu0 %v310
    %602 = vmatpush1.bf16.msra.mxu0 %v309
    %603 = vmatprep.subr.bf16.mxu0 %v314
    %604 = vmatpush1.bf16.msra.mxu0 %v313
    %605 = vmatprep.subr.bf16.mxu0 %v318
    %606 = vmatpush1.bf16.msra.mxu0 %v317
    %607 = vmatprep.subr.bf16.mxu0 %v322
    %608 = vmatpush1.bf16.msra.mxu0 %v321
    %609 = vmatprep.subr.bf16.mxu0 %v326
    %610 = vmatpush1.bf16.msra.mxu0 %v325
    %611 = vmatprep.subr.bf16.mxu0 %v330
    %612 = vmatpush1.bf16.msra.mxu0 %v329
    %613 = vmatprep.subr.bf16.mxu0 0
    %614 = vmatpush1.bf16.msra.mxu0 0
    %615 = vmatprep.subr.bf16.mxu0 0
    %616 = vmatpush1.bf16.msra.mxu0 0
    %617 = vmatprep.subr.bf16.mxu0 0
    %618 = vmatpush1.bf16.msra.mxu0 0
    %619 = vmatprep.subr.bf16.mxu0 0
    %620 = vmatpush1.bf16.msra.mxu0 0
    %621 = vmatprep.subr.bf16.mxu0 0
    %622 = vmatpush1.bf16.msra.mxu0 0
    %623 = vmatprep.subr.bf16.mxu0 0
    %624 = vmatpush1.bf16.msra.mxu0 0
    %625 = vmatprep.subr.bf16.mxu0 0
    %626 = vmatpush1.bf16.msra.mxu0 0
    %627 = vmatprep.subr.bf16.mxu0 0
    %628 = vmatpush1.bf16.msra.mxu0 0
    %629 = vmatprep.mubr.bf16.mxu0 0
    %630 = vmatmul.mubr.bf16.gmra.mrb[0].mxu0 %v596
    %v631 = vpop.f32.mrb[0].mxu0
    %v632 = vadd.f32 %v592, %v631
    %v633 = vpop.f32.mrb[0].mxu0
    %v634 = vadd.f32 %v593, %v633
    %v635 = vpop.f32.mrb[0].mxu0
    %v636 = vpop.f32.mrb[0].mxu0
    %637 = vdwg.mxu0
    %638 = vmatprep.subr.bf16.mxu0 %v304
    %639 = vmatpush1.bf16.msra.mxu0 %v303
    %640 = vmatprep.subr.bf16.mxu0 %v308
    %641 = vmatpush1.bf16.msra.mxu0 %v307
    %642 = vmatprep.subr.bf16.mxu0 %v312
    %643 = vmatpush1.bf16.msra.mxu0 %v311
    %644 = vmatprep.subr.bf16.mxu0 %v316
    %645 = vmatpush1.bf16.msra.mxu0 %v315
    %646 = vmatprep.subr.bf16.mxu0 %v320
    %647 = vmatpush1.bf16.msra.mxu0 %v319
    %648 = vmatprep.subr.bf16.mxu0 %v324
    %649 = vmatpush1.bf16.msra.mxu0 %v323
    %650 = vmatprep.subr.bf16.mxu0 %v328
    %651 = vmatpush1.bf16.msra.mxu0 %v327
    %652 = vmatprep.subr.bf16.mxu0 %v332
    %653 = vmatpush1.bf16.msra.mxu0 %v331
    %654 = vmatprep.subr.bf16.mxu0 0
    %655 = vmatpush1.bf16.msra.mxu0 0
    %656 = vmatprep.subr.bf16.mxu0 0
    %657 = vmatpush1.bf16.msra.mxu0 0
    %658 = vmatprep.subr.bf16.mxu0 0
    %659 = vmatpush1.bf16.msra.mxu0 0
    %660 = vmatprep.subr.bf16.mxu0 0
    %661 = vmatpush1.bf16.msra.mxu0 0
    %662 = vmatprep.subr.bf16.mxu0 0
    %663 = vmatpush1.bf16.msra.mxu0 0
    %664 = vmatprep.subr.bf16.mxu0 0
    %665 = vmatpush1.bf16.msra.mxu0 0
    %666 = vmatprep.subr.bf16.mxu0 0
    %667 = vmatpush1.bf16.msra.mxu0 0
    %668 = vmatprep.subr.bf16.mxu0 0
    %669 = vmatpush1.bf16.msra.mxu0 0
    %670 = vmatprep.mubr.bf16.mxu0 0
    %671 = vmatmul.mubr.bf16.gmra.mrb[0].mxu0 %v596
    %v672 = vpop.f32.mrb[0].mxu0
    %v673 = vadd.f32 %v594, %v672
    %v674 = vpop.f32.mrb[0].mxu0
    %v675 = vadd.f32 %v595, %v674
    %v676 = vpop.f32.mrb[0].mxu0
    %v677 = vpop.f32.mrb[0].mxu0
    %678 = vdwg.mxu0
    %v679 = vmul.f32 %v632, 0.5
    %v680 = vtanh.pop %v679
    %v681 = vmul.f32 %v680, 0.5
    %v682 = vadd.f32 %v681, 0.5
    %v683 = vmul.f32 %v634, 0.5
    %v684 = vtanh.pop %v683
    %v685 = vmul.f32 %v684, 0.5
    %v686 = vadd.f32 %v685, 0.5
    %v687 = vtanh.pop %v673
    %v688 = vmul.f32 %v675, 0.5
    %v689 = vtanh.pop %v688
    %v690 = vmul.f32 %v689, 0.5
    %v691 = vadd.f32 %v690, 0.5
    %v692 = vmul.f32 %v686, %v578
    %v693 = vmul.f32 %v682, %v687
    %v694 = vadd.f32 %v692, %v693
    %v695 = vtanh.pop %v694
    %v696 = vmul.f32 %v691, %v695
    %s697 = scalar_lea.vmem %s0, 32
    %v698 = vld [vmem:[%s697] sm:$0xff]
    %700 = vset.pattern.permute.xlu0 0
    %701 = vperm.xlu0 %700, %v698
    %v702 = vpop.permute.xlu0 %701
    %v704 = vmul.f32 %v702, %v136
    %v705 = vmul.f32 %v702, %v140
    %v706 = vmul.f32 %v702, %v144
    %v707 = vmul.f32 %v702, %v148
    %v708 = vadd.f32 %v704, %v156
    %v709 = vadd.f32 %v705, %v160
    %v710 = vadd.f32 %v706, %v164
    %v711 = vadd.f32 %v707, %v168
    %v712 = vpack.c.bf16 %v696, %v696
    %713 = vmatprep.subr.bf16.mxu0 %v302
    %714 = vmatpush1.bf16.msra.mxu0 %v301
    %715 = vmatprep.subr.bf16.mxu0 %v306
    %716 = vmatpush1.bf16.msra.mxu0 %v305
    %717 = vmatprep.subr.bf16.mxu0 %v310
    %718 = vmatpush1.bf16.msra.mxu0 %v309
    %719 = vmatprep.subr.bf16.mxu0 %v314
    %720 = vmatpush1.bf16.msra.mxu0 %v313
    %721 = vmatprep.subr.bf16.mxu0 %v318
    %722 = vmatpush1.bf16.msra.mxu0 %v317
    %723 = vmatprep.subr.bf16.mxu0 %v322
    %724 = vmatpush1.bf16.msra.mxu0 %v321
    %725 = vmatprep.subr.bf16.mxu0 %v326
    %726 = vmatpush1.bf16.msra.mxu0 %v325
    %727 = vmatprep.subr.bf16.mxu0 %v330
    %728 = vmatpush1.bf16.msra.mxu0 %v329
    %729 = vmatprep.subr.bf16.mxu0 0
    %730 = vmatpush1.bf16.msra.mxu0 0
    %731 = vmatprep.subr.bf16.mxu0 0
    %732 = vmatpush1.bf16.msra.mxu0 0
    %733 = vmatprep.subr.bf16.mxu0 0
    %734 = vmatpush1.bf16.msra.mxu0 0
    %735 = vmatprep.subr.bf16.mxu0 0
    %736 = vmatpush1.bf16.msra.mxu0 0
    %737 = vmatprep.subr.bf16.mxu0 0
    %738 = vmatpush1.bf16.msra.mxu0 0
    %739 = vmatprep.subr.bf16.mxu0 0
    %740 = vmatpush1.bf16.msra.mxu0 0
    %741 = vmatprep.subr.bf16.mxu0 0
    %742 = vmatpush1.bf16.msra.mxu0 0
    %743 = vmatprep.subr.bf16.mxu0 0
    %744 = vmatpush1.bf16.msra.mxu0 0
    %745 = vmatprep.mubr.bf16.mxu0 0
    %746 = vmatmul.mubr.bf16.gmra.mrb[0].mxu0 %v712
    %v747 = vpop.f32.mrb[0].mxu0
    %v748 = vadd.f32 %v708, %v747
    %v749 = vpop.f32.mrb[0].mxu0
    %v750 = vadd.f32 %v709, %v749
    %v751 = vpop.f32.mrb[0].mxu0
    %v752 = vpop.f32.mrb[0].mxu0
    %753 = vdwg.mxu0
    %754 = vmatprep.subr.bf16.mxu0 %v304
    %755 = vmatpush1.bf16.msra.mxu0 %v303
    %756 = vmatprep.subr.bf16.mxu0 %v308
    %757 = vmatpush1.bf16.msra.mxu0 %v307
    %758 = vmatprep.subr.bf16.mxu0 %v312
    %759 = vmatpush1.bf16.msra.mxu0 %v311
    %760 = vmatprep.subr.bf16.mxu0 %v316
    %761 = vmatpush1.bf16.msra.mxu0 %v315
    %762 = vmatprep.subr.bf16.mxu0 %v320
    %763 = vmatpush1.bf16.msra.mxu0 %v319
    %764 = vmatprep.subr.bf16.mxu0 %v324
    %765 = vmatpush1.bf16.msra.mxu0 %v323
    %766 = vmatprep.subr.bf16.mxu0 %v328
    %767 = vmatpush1.bf16.msra.mxu0 %v327
    %768 = vmatprep.subr.bf16.mxu0 %v332
    %769 = vmatpush1.bf16.msra.mxu0 %v331
    %770 = vmatprep.subr.bf16.mxu0 0
    %771 = vmatpush1.bf16.msra.mxu0 0
    %772 = vmatprep.subr.bf16.mxu0 0
    %773 = vmatpush1.bf16.msra.mxu0 0
    %774 = vmatprep.subr.bf16.mxu0 0
    %775 = vmatpush1.bf16.msra.mxu0 0
    %776 = vmatprep.subr.bf16.mxu0 0
    %777 = vmatpush1.bf16.msra.mxu0 0
    %778 = vmatprep.subr.bf16.mxu0 0
    %779 = vmatpush1.bf16.msra.mxu0 0
    %780 = vmatprep.subr.bf16.mxu0 0
    %781 = vmatpush1.bf16.msra.mxu0 0
    %782 = vmatprep.subr.bf16.mxu0 0
    %783 = vmatpush1.bf16.msra.mxu0 0
    %784 = vmatprep.subr.bf16.mxu0 0
    %785 = vmatpush1.bf16.msra.mxu0 0
    %786 = vmatprep.mubr.bf16.mxu0 0
    %787 = vmatmul.mubr.bf16.gmra.mrb[0].mxu0 %v712
    %v788 = vpop.f32.mrb[0].mxu0
    %v789 = vadd.f32 %v710, %v788
    %v790 = vpop.f32.mrb[0].mxu0
    %v791 = vadd.f32 %v711, %v790
    %v792 = vpop.f32.mrb[0].mxu0
    %v793 = vpop.f32.mrb[0].mxu0
    %794 = vdwg.mxu0
    %v795 = vmul.f32 %v748, 0.5
    %v796 = vtanh.pop %v795
    %v797 = vmul.f32 %v796, 0.5
    %v798 = vadd.f32 %v797, 0.5
    %v799 = vmul.f32 %v750, 0.5
    %v800 = vtanh.pop %v799
    %v801 = vmul.f32 %v800, 0.5
    %v802 = vadd.f32 %v801, 0.5
    %v803 = vtanh.pop %v789
    %v804 = vmul.f32 %v791, 0.5
    %v805 = vtanh.pop %v804
    %v806 = vmul.f32 %v805, 0.5
    %v807 = vadd.f32 %v806, 0.5
    %v808 = vmul.f32 %v802, %v694
    %v809 = vmul.f32 %v798, %v803
    %v810 = vadd.f32 %v808, %v809
    %v811 = vtanh.pop %v810
    %v812 = vmul.f32 %v807, %v811
    %s813 = scalar_lea.vmem %s0, 40
    %v814 = vld [vmem:[%s813] sm:$0xff]
    %816 = vset.pattern.permute.xlu0 0
    %817 = vperm.xlu0 %816, %v814
    %v818 = vpop.permute.xlu0 %817
    %v820 = vmul.f32 %v818, %v136
    %v821 = vmul.f32 %v818, %v140
    %v822 = vmul.f32 %v818, %v144
    %v823 = vmul.f32 %v818, %v148
    %v824 = vadd.f32 %v820, %v156
    %v825 = vadd.f32 %v821, %v160
    %v826 = vadd.f32 %v822, %v164
    %v827 = vadd.f32 %v823, %v168
    %v828 = vpack.c.bf16 %v812, %v812
    %829 = vmatprep.subr.bf16.mxu0 %v302
    %830 = vmatpush1.bf16.msra.mxu0 %v301
    %831 = vmatprep.subr.bf16.mxu0 %v306
    %832 = vmatpush1.bf16.msra.mxu0 %v305
    %833 = vmatprep.subr.bf16.mxu0 %v310
    %834 = vmatpush1.bf16.msra.mxu0 %v309
    %835 = vmatprep.subr.bf16.mxu0 %v314
    %836 = vmatpush1.bf16.msra.mxu0 %v313
    %837 = vmatprep.subr.bf16.mxu0 %v318
    %838 = vmatpush1.bf16.msra.mxu0 %v317
    %839 = vmatprep.subr.bf16.mxu0 %v322
    %840 = vmatpush1.bf16.msra.mxu0 %v321
    %841 = vmatprep.subr.bf16.mxu0 %v326
    %842 = vmatpush1.bf16.msra.mxu0 %v325
    %843 = vmatprep.subr.bf16.mxu0 %v330
    %844 = vmatpush1.bf16.msra.mxu0 %v329
    %845 = vmatprep.subr.bf16.mxu0 0
    %846 = vmatpush1.bf16.msra.mxu0 0
    %847 = vmatprep.subr.bf16.mxu0 0
    %848 = vmatpush1.bf16.msra.mxu0 0
    %849 = vmatprep.subr.bf16.mxu0 0
    %850 = vmatpush1.bf16.msra.mxu0 0
    %851 = vmatprep.subr.bf16.mxu0 0
    %852 = vmatpush1.bf16.msra.mxu0 0
    %853 = vmatprep.subr.bf16.mxu0 0
    %854 = vmatpush1.bf16.msra.mxu0 0
    %855 = vmatprep.subr.bf16.mxu0 0
    %856 = vmatpush1.bf16.msra.mxu0 0
    %857 = vmatprep.subr.bf16.mxu0 0
    %858 = vmatpush1.bf16.msra.mxu0 0
    %859 = vmatprep.subr.bf16.mxu0 0
    %860 = vmatpush1.bf16.msra.mxu0 0
    %861 = vmatprep.mubr.bf16.mxu0 0
    %862 = vmatmul.mubr.bf16.gmra.mrb[0].mxu0 %v828
    %v863 = vpop.f32.mrb[0].mxu0
    %v864 = vadd.f32 %v824, %v863
    %v865 = vpop.f32.mrb[0].mxu0
    %v866 = vadd.f32 %v825, %v865
    %v867 = vpop.f32.mrb[0].mxu0
    %v868 = vpop.f32.mrb[0].mxu0
    %869 = vdwg.mxu0
    %870 = vmatprep.subr.bf16.mxu0 %v304
    %871 = vmatpush1.bf16.msra.mxu0 %v303
    %872 = vmatprep.subr.bf16.mxu0 %v308
    %873 = vmatpush1.bf16.msra.mxu0 %v307
    %874 = vmatprep.subr.bf16.mxu0 %v312
    %875 = vmatpush1.bf16.msra.mxu0 %v311
    %876 = vmatprep.subr.bf16.mxu0 %v316
    %877 = vmatpush1.bf16.msra.mxu0 %v315
    %878 = vmatprep.subr.bf16.mxu0 %v320
    %879 = vmatpush1.bf16.msra.mxu0 %v319
    %880 = vmatprep.subr.bf16.mxu0 %v324
    %881 = vmatpush1.bf16.msra.mxu0 %v323
    %882 = vmatprep.subr.bf16.mxu0 %v328
    %883 = vmatpush1.bf16.msra.mxu0 %v327
    %884 = vmatprep.subr.bf16.mxu0 %v332
    %885 = vmatpush1.bf16.msra.mxu0 %v331
    %886 = vmatprep.subr.bf16.mxu0 0
    %887 = vmatpush1.bf16.msra.mxu0 0
    %888 = vmatprep.subr.bf16.mxu0 0
    %889 = vmatpush1.bf16.msra.mxu0 0
    %890 = vmatprep.subr.bf16.mxu0 0
    %891 = vmatpush1.bf16.msra.mxu0 0
    %892 = vmatprep.subr.bf16.mxu0 0
    %893 = vmatpush1.bf16.msra.mxu0 0
    %894 = vmatprep.subr.bf16.mxu0 0
    %895 = vmatpush1.bf16.msra.mxu0 0
    %896 = vmatprep.subr.bf16.mxu0 0
    %897 = vmatpush1.bf16.msra.mxu0 0
    %898 = vmatprep.subr.bf16.mxu0 0
    %899 = vmatpush1.bf16.msra.mxu0 0
    %900 = vmatprep.subr.bf16.mxu0 0
    %901 = vmatpush1.bf16.msra.mxu0 0
    %902 = vmatprep.mubr.bf16.mxu0 0
    %903 = vmatmul.mubr.bf16.gmra.mrb[0].mxu0 %v828
    %v904 = vpop.f32.mrb[0].mxu0
    %v905 = vadd.f32 %v826, %v904
    %v906 = vpop.f32.mrb[0].mxu0
    %v907 = vadd.f32 %v827, %v906
    %v908 = vpop.f32.mrb[0].mxu0
    %v909 = vpop.f32.mrb[0].mxu0
    %910 = vdwg.mxu0
    %v911 = vmul.f32 %v864, 0.5
    %v912 = vtanh.pop %v911
    %v913 = vmul.f32 %v912, 0.5
    %v914 = vadd.f32 %v913, 0.5
    %v915 = vmul.f32 %v866, 0.5
    %v916 = vtanh.pop %v915
    %v917 = vmul.f32 %v916, 0.5
    %v918 = vadd.f32 %v917, 0.5
    %v919 = vtanh.pop %v905
    %v920 = vmul.f32 %v907, 0.5
    %v921 = vtanh.pop %v920
    %v922 = vmul.f32 %v921, 0.5
    %v923 = vadd.f32 %v922, 0.5
    %v924 = vmul.f32 %v918, %v810
    %v925 = vmul.f32 %v914, %v919
    %v926 = vadd.f32 %v924, %v925
    %v927 = vtanh.pop %v926
    %v928 = vmul.f32 %v923, %v927
    %s929 = scalar_lea.vmem %s0, 48
    %v930 = vld [vmem:[%s929] sm:$0xff]
    %932 = vset.pattern.permute.xlu0 0
    %933 = vperm.xlu0 %932, %v930
    %v934 = vpop.permute.xlu0 %933
    %v936 = vmul.f32 %v934, %v136
    %v937 = vmul.f32 %v934, %v140
    %v938 = vmul.f32 %v934, %v144
    %v939 = vmul.f32 %v934, %v148
    %v940 = vadd.f32 %v936, %v156
    %v941 = vadd.f32 %v937, %v160
    %v942 = vadd.f32 %v938, %v164
    %v943 = vadd.f32 %v939, %v168
    %v944 = vpack.c.bf16 %v928, %v928
    %945 = vmatprep.subr.bf16.mxu0 %v302
    %946 = vmatpush1.bf16.msra.mxu0 %v301
    %947 = vmatprep.subr.bf16.mxu0 %v306
    %948 = vmatpush1.bf16.msra.mxu0 %v305
    %949 = vmatprep.subr.bf16.mxu0 %v310
    %950 = vmatpush1.bf16.msra.mxu0 %v309
    %951 = vmatprep.subr.bf16.mxu0 %v314
    %952 = vmatpush1.bf16.msra.mxu0 %v313
    %953 = vmatprep.subr.bf16.mxu0 %v318
    %954 = vmatpush1.bf16.msra.mxu0 %v317
    %955 = vmatprep.subr.bf16.mxu0 %v322
    %956 = vmatpush1.bf16.msra.mxu0 %v321
    %957 = vmatprep.subr.bf16.mxu0 %v326
    %958 = vmatpush1.bf16.msra.mxu0 %v325
    %959 = vmatprep.subr.bf16.mxu0 %v330
    %960 = vmatpush1.bf16.msra.mxu0 %v329
    %961 = vmatprep.subr.bf16.mxu0 0
    %962 = vmatpush1.bf16.msra.mxu0 0
    %963 = vmatprep.subr.bf16.mxu0 0
    %964 = vmatpush1.bf16.msra.mxu0 0
    %965 = vmatprep.subr.bf16.mxu0 0
    %966 = vmatpush1.bf16.msra.mxu0 0
    %967 = vmatprep.subr.bf16.mxu0 0
    %968 = vmatpush1.bf16.msra.mxu0 0
    %969 = vmatprep.subr.bf16.mxu0 0
    %970 = vmatpush1.bf16.msra.mxu0 0
    %971 = vmatprep.subr.bf16.mxu0 0
    %972 = vmatpush1.bf16.msra.mxu0 0
    %973 = vmatprep.subr.bf16.mxu0 0
    %974 = vmatpush1.bf16.msra.mxu0 0
    %975 = vmatprep.subr.bf16.mxu0 0
    %976 = vmatpush1.bf16.msra.mxu0 0
    %977 = vmatprep.mubr.bf16.mxu0 0
    %978 = vmatmul.mubr.bf16.gmra.mrb[0].mxu0 %v944
    %v979 = vpop.f32.mrb[0].mxu0
    %v980 = vadd.f32 %v940, %v979
    %v981 = vpop.f32.mrb[0].mxu0
    %v982 = vadd.f32 %v941, %v981
    %v983 = vpop.f32.mrb[0].mxu0
    %v984 = vpop.f32.mrb[0].mxu0
    %985 = vdwg.mxu0
    %986 = vmatprep.subr.bf16.mxu0 %v304
    %987 = vmatpush1.bf16.msra.mxu0 %v303
    %988 = vmatprep.subr.bf16.mxu0 %v308
    %989 = vmatpush1.bf16.msra.mxu0 %v307
    %990 = vmatprep.subr.bf16.mxu0 %v312
    %991 = vmatpush1.bf16.msra.mxu0 %v311
    %992 = vmatprep.subr.bf16.mxu0 %v316
    %993 = vmatpush1.bf16.msra.mxu0 %v315
    %994 = vmatprep.subr.bf16.mxu0 %v320
    %995 = vmatpush1.bf16.msra.mxu0 %v319
    %996 = vmatprep.subr.bf16.mxu0 %v324
    %997 = vmatpush1.bf16.msra.mxu0 %v323
    %998 = vmatprep.subr.bf16.mxu0 %v328
    %999 = vmatpush1.bf16.msra.mxu0 %v327
    %1000 = vmatprep.subr.bf16.mxu0 %v332
    %1001 = vmatpush1.bf16.msra.mxu0 %v331
    %1002 = vmatprep.subr.bf16.mxu0 0
    %1003 = vmatpush1.bf16.msra.mxu0 0
    %1004 = vmatprep.subr.bf16.mxu0 0
    %1005 = vmatpush1.bf16.msra.mxu0 0
    %1006 = vmatprep.subr.bf16.mxu0 0
    %1007 = vmatpush1.bf16.msra.mxu0 0
    %1008 = vmatprep.subr.bf16.mxu0 0
    %1009 = vmatpush1.bf16.msra.mxu0 0
    %1010 = vmatprep.subr.bf16.mxu0 0
    %1011 = vmatpush1.bf16.msra.mxu0 0
    %1012 = vmatprep.subr.bf16.mxu0 0
    %1013 = vmatpush1.bf16.msra.mxu0 0
    %1014 = vmatprep.subr.bf16.mxu0 0
    %1015 = vmatpush1.bf16.msra.mxu0 0
    %1016 = vmatprep.subr.bf16.mxu0 0
    %1017 = vmatpush1.bf16.msra.mxu0 0
    %1018 = vmatprep.mubr.bf16.mxu0 0
    %1019 = vmatmul.mubr.bf16.gmra.mrb[0].mxu0 %v944
    %v1020 = vpop.f32.mrb[0].mxu0
    %v1021 = vadd.f32 %v942, %v1020
    %v1022 = vpop.f32.mrb[0].mxu0
    %v1023 = vadd.f32 %v943, %v1022
    %v1024 = vpop.f32.mrb[0].mxu0
    %v1025 = vpop.f32.mrb[0].mxu0
    %1026 = vdwg.mxu0
    %v1027 = vmul.f32 %v980, 0.5
    %v1028 = vtanh.pop %v1027
    %v1029 = vmul.f32 %v1028, 0.5
    %v1030 = vadd.f32 %v1029, 0.5
    %v1031 = vmul.f32 %v982, 0.5
    %v1032 = vtanh.pop %v1031
    %v1033 = vmul.f32 %v1032, 0.5
    %v1034 = vadd.f32 %v1033, 0.5
    %v1035 = vtanh.pop %v1021
    %v1036 = vmul.f32 %v1023, 0.5
    %v1037 = vtanh.pop %v1036
    %v1038 = vmul.f32 %v1037, 0.5
    %v1039 = vadd.f32 %v1038, 0.5
    %v1040 = vmul.f32 %v1034, %v926
    %v1041 = vmul.f32 %v1030, %v1035
    %v1042 = vadd.f32 %v1040, %v1041
    %v1043 = vtanh.pop %v1042
    %v1044 = vmul.f32 %v1039, %v1043
    %s1045 = scalar_lea.vmem %s0, 56
    %v1046 = vld [vmem:[%s1045] sm:$0xff]
    %1048 = vset.pattern.permute.xlu0 0
    %1049 = vperm.xlu0 %1048, %v1046
    %v1050 = vpop.permute.xlu0 %1049
    %v1052 = vmul.f32 %v1050, %v136
    %v1053 = vmul.f32 %v1050, %v140
    %v1054 = vmul.f32 %v1050, %v144
    %v1055 = vmul.f32 %v1050, %v148
    %v1056 = vadd.f32 %v1052, %v156
    %v1057 = vadd.f32 %v1053, %v160
    %v1058 = vadd.f32 %v1054, %v164
    %v1059 = vadd.f32 %v1055, %v168
    %v1060 = vpack.c.bf16 %v1044, %v1044
    %1061 = vmatprep.subr.bf16.mxu0 %v302
    %1062 = vmatpush1.bf16.msra.mxu0 %v301
    %1063 = vmatprep.subr.bf16.mxu0 %v306
    %1064 = vmatpush1.bf16.msra.mxu0 %v305
    %1065 = vmatprep.subr.bf16.mxu0 %v310
    %1066 = vmatpush1.bf16.msra.mxu0 %v309
    %1067 = vmatprep.subr.bf16.mxu0 %v314
    %1068 = vmatpush1.bf16.msra.mxu0 %v313
    %1069 = vmatprep.subr.bf16.mxu0 %v318
    %1070 = vmatpush1.bf16.msra.mxu0 %v317
    %1071 = vmatprep.subr.bf16.mxu0 %v322
    %1072 = vmatpush1.bf16.msra.mxu0 %v321
    %1073 = vmatprep.subr.bf16.mxu0 %v326
    %1074 = vmatpush1.bf16.msra.mxu0 %v325
    %1075 = vmatprep.subr.bf16.mxu0 %v330
    %1076 = vmatpush1.bf16.msra.mxu0 %v329
    %1077 = vmatprep.subr.bf16.mxu0 0
    %1078 = vmatpush1.bf16.msra.mxu0 0
    %1079 = vmatprep.subr.bf16.mxu0 0
    %1080 = vmatpush1.bf16.msra.mxu0 0
    %1081 = vmatprep.subr.bf16.mxu0 0
    %1082 = vmatpush1.bf16.msra.mxu0 0
    %1083 = vmatprep.subr.bf16.mxu0 0
    %1084 = vmatpush1.bf16.msra.mxu0 0
    %1085 = vmatprep.subr.bf16.mxu0 0
    %1086 = vmatpush1.bf16.msra.mxu0 0
    %1087 = vmatprep.subr.bf16.mxu0 0
    %1088 = vmatpush1.bf16.msra.mxu0 0
    %1089 = vmatprep.subr.bf16.mxu0 0
    %1090 = vmatpush1.bf16.msra.mxu0 0
    %1091 = vmatprep.subr.bf16.mxu0 0
    %1092 = vmatpush1.bf16.msra.mxu0 0
    %1093 = vmatprep.mubr.bf16.mxu0 0
    %1094 = vmatmul.mubr.bf16.gmra.mrb[0].mxu0 %v1060
    %v1095 = vpop.f32.mrb[0].mxu0
    %v1096 = vadd.f32 %v1056, %v1095
    %v1097 = vpop.f32.mrb[0].mxu0
    %v1098 = vadd.f32 %v1057, %v1097
    %v1099 = vpop.f32.mrb[0].mxu0
    %v1100 = vpop.f32.mrb[0].mxu0
    %1101 = vdwg.mxu0
    %1102 = vmatprep.subr.bf16.mxu0 %v304
    %1103 = vmatpush1.bf16.msra.mxu0 %v303
    %1104 = vmatprep.subr.bf16.mxu0 %v308
    %1105 = vmatpush1.bf16.msra.mxu0 %v307
    %1106 = vmatprep.subr.bf16.mxu0 %v312
    %1107 = vmatpush1.bf16.msra.mxu0 %v311
    %1108 = vmatprep.subr.bf16.mxu0 %v316
    %1109 = vmatpush1.bf16.msra.mxu0 %v315
    %1110 = vmatprep.subr.bf16.mxu0 %v320
    %1111 = vmatpush1.bf16.msra.mxu0 %v319
    %1112 = vmatprep.subr.bf16.mxu0 %v324
    %1113 = vmatpush1.bf16.msra.mxu0 %v323
    %1114 = vmatprep.subr.bf16.mxu0 %v328
    %1115 = vmatpush1.bf16.msra.mxu0 %v327
    %1116 = vmatprep.subr.bf16.mxu0 %v332
    %1117 = vmatpush1.bf16.msra.mxu0 %v331
    %1118 = vmatprep.subr.bf16.mxu0 0
    %1119 = vmatpush1.bf16.msra.mxu0 0
    %1120 = vmatprep.subr.bf16.mxu0 0
    %1121 = vmatpush1.bf16.msra.mxu0 0
    %1122 = vmatprep.subr.bf16.mxu0 0
    %1123 = vmatpush1.bf16.msra.mxu0 0
    %1124 = vmatprep.subr.bf16.mxu0 0
    %1125 = vmatpush1.bf16.msra.mxu0 0
    %1126 = vmatprep.subr.bf16.mxu0 0
    %1127 = vmatpush1.bf16.msra.mxu0 0
    %1128 = vmatprep.subr.bf16.mxu0 0
    %1129 = vmatpush1.bf16.msra.mxu0 0
    %1130 = vmatprep.subr.bf16.mxu0 0
    %1131 = vmatpush1.bf16.msra.mxu0 0
    %1132 = vmatprep.subr.bf16.mxu0 0
    %1133 = vmatpush1.bf16.msra.mxu0 0
    %1134 = vmatprep.mubr.bf16.mxu0 0
    %1135 = vmatmul.mubr.bf16.gmra.mrb[0].mxu0 %v1060
    %v1136 = vpop.f32.mrb[0].mxu0
    %v1137 = vadd.f32 %v1058, %v1136
    %v1138 = vpop.f32.mrb[0].mxu0
    %v1139 = vadd.f32 %v1059, %v1138
    %v1140 = vpop.f32.mrb[0].mxu0
    %v1141 = vpop.f32.mrb[0].mxu0
    %1142 = vdwg.mxu0
    %v1143 = vmul.f32 %v1096, 0.5
    %v1144 = vtanh.pop %v1143
    %v1145 = vmul.f32 %v1144, 0.5
    %v1146 = vadd.f32 %v1145, 0.5
    %v1147 = vmul.f32 %v1098, 0.5
    %v1148 = vtanh.pop %v1147
    %v1149 = vmul.f32 %v1148, 0.5
    %v1150 = vadd.f32 %v1149, 0.5
    %v1151 = vtanh.pop %v1137
    %v1152 = vmul.f32 %v1139, 0.5
    %v1153 = vtanh.pop %v1152
    %v1154 = vmul.f32 %v1153, 0.5
    %v1155 = vadd.f32 %v1154, 0.5
    %v1156 = vmul.f32 %v1150, %v1042
    %v1157 = vmul.f32 %v1146, %v1151
    %v1158 = vadd.f32 %v1156, %v1157
    %v1159 = vtanh.pop %v1158
    %v1160 = vmul.f32 %v1155, %v1159
    %v1161 = vpack.c.bf16 %v1160, %v1160
    %1162 = vmatprep.subr.bf16.mxu0 %v302
    %1163 = vmatpush1.bf16.msra.mxu0 %v301
    %1164 = vmatprep.subr.bf16.mxu0 %v306
    %1165 = vmatpush1.bf16.msra.mxu0 %v305
    %1166 = vmatprep.subr.bf16.mxu0 %v310
    %1167 = vmatpush1.bf16.msra.mxu0 %v309
    %1168 = vmatprep.subr.bf16.mxu0 %v314
    %1169 = vmatpush1.bf16.msra.mxu0 %v313
    %1170 = vmatprep.subr.bf16.mxu0 %v318
    %1171 = vmatpush1.bf16.msra.mxu0 %v317
    %1172 = vmatprep.subr.bf16.mxu0 %v322
    %1173 = vmatpush1.bf16.msra.mxu0 %v321
    %1174 = vmatprep.subr.bf16.mxu0 %v326
    %1175 = vmatpush1.bf16.msra.mxu0 %v325
    %1176 = vmatprep.subr.bf16.mxu0 %v330
    %1177 = vmatpush1.bf16.msra.mxu0 %v329
    %1178 = vmatprep.subr.bf16.mxu0 0
    %1179 = vmatpush1.bf16.msra.mxu0 0
    %1180 = vmatprep.subr.bf16.mxu0 0
    %1181 = vmatpush1.bf16.msra.mxu0 0
    %1182 = vmatprep.subr.bf16.mxu0 0
    %1183 = vmatpush1.bf16.msra.mxu0 0
    %1184 = vmatprep.subr.bf16.mxu0 0
    %1185 = vmatpush1.bf16.msra.mxu0 0
    %1186 = vmatprep.subr.bf16.mxu0 0
    %1187 = vmatpush1.bf16.msra.mxu0 0
    %1188 = vmatprep.subr.bf16.mxu0 0
    %1189 = vmatpush1.bf16.msra.mxu0 0
    %1190 = vmatprep.subr.bf16.mxu0 0
    %1191 = vmatpush1.bf16.msra.mxu0 0
    %1192 = vmatprep.subr.bf16.mxu0 0
    %1193 = vmatpush1.bf16.msra.mxu0 0
    %1194 = vmatprep.mubr.bf16.mxu0 0
    %1195 = vmatmul.mubr.bf16.gmra.mrb[0].mxu0 %v1161
    %v1196 = vpop.f32.mrb[0].mxu0
    %v1197 = vadd.f32 %v156, %v1196
    %v1198 = vpop.f32.mrb[0].mxu0
    %v1199 = vadd.f32 %v160, %v1198
    %v1200 = vpop.f32.mrb[0].mxu0
    %v1201 = vpop.f32.mrb[0].mxu0
    %1202 = vdwg.mxu0
    %1203 = vmatprep.subr.bf16.mxu0 %v304
    %1204 = vmatpush1.bf16.msra.mxu0 %v303
    %1205 = vmatprep.subr.bf16.mxu0 %v308
    %1206 = vmatpush1.bf16.msra.mxu0 %v307
    %1207 = vmatprep.subr.bf16.mxu0 %v312
    %1208 = vmatpush1.bf16.msra.mxu0 %v311
    %1209 = vmatprep.subr.bf16.mxu0 %v316
    %1210 = vmatpush1.bf16.msra.mxu0 %v315
    %1211 = vmatprep.subr.bf16.mxu0 %v320
    %1212 = vmatpush1.bf16.msra.mxu0 %v319
    %1213 = vmatprep.subr.bf16.mxu0 %v324
    %1214 = vmatpush1.bf16.msra.mxu0 %v323
    %1215 = vmatprep.subr.bf16.mxu0 %v328
    %1216 = vmatpush1.bf16.msra.mxu0 %v327
    %1217 = vmatprep.subr.bf16.mxu0 %v332
    %1218 = vmatpush1.bf16.msra.mxu0 %v331
    %1219 = vmatprep.subr.bf16.mxu0 0
    %1220 = vmatpush1.bf16.msra.mxu0 0
    %1221 = vmatprep.subr.bf16.mxu0 0
    %1222 = vmatpush1.bf16.msra.mxu0 0
    %1223 = vmatprep.subr.bf16.mxu0 0
    %1224 = vmatpush1.bf16.msra.mxu0 0
    %1225 = vmatprep.subr.bf16.mxu0 0
    %1226 = vmatpush1.bf16.msra.mxu0 0
    %1227 = vmatprep.subr.bf16.mxu0 0
    %1228 = vmatpush1.bf16.msra.mxu0 0
    %1229 = vmatprep.subr.bf16.mxu0 0
    %1230 = vmatpush1.bf16.msra.mxu0 0
    %1231 = vmatprep.subr.bf16.mxu0 0
    %1232 = vmatpush1.bf16.msra.mxu0 0
    %1233 = vmatprep.subr.bf16.mxu0 0
    %1234 = vmatpush1.bf16.msra.mxu0 0
    %1235 = vmatprep.mubr.bf16.mxu0 0
    %1236 = vmatmul.mubr.bf16.gmra.mrb[0].mxu0 %v1161
    %v1237 = vpop.f32.mrb[0].mxu0
    %v1238 = vadd.f32 %v164, %v1237
    %v1239 = vpop.f32.mrb[0].mxu0
    %v1240 = vadd.f32 %v168, %v1239
    %v1241 = vpop.f32.mrb[0].mxu0
    %v1242 = vpop.f32.mrb[0].mxu0
    %1243 = vdwg.mxu0
    %v1244 = vmul.f32 %v1197, 0.5
    %v1245 = vtanh.pop %v1244
    %v1246 = vmul.f32 %v1245, 0.5
    %v1247 = vadd.f32 %v1246, 0.5
    %v1248 = vmul.f32 %v1199, 0.5
    %v1249 = vtanh.pop %v1248
    %v1250 = vmul.f32 %v1249, 0.5
    %v1251 = vadd.f32 %v1250, 0.5
    %v1252 = vtanh.pop %v1238
    %v1253 = vmul.f32 %v1240, 0.5
    %v1254 = vtanh.pop %v1253
    %v1255 = vmul.f32 %v1254, 0.5
    %v1256 = vadd.f32 %v1255, 0.5
    %v1257 = vmul.f32 %v1251, %v1158
    %v1258 = vmul.f32 %v1247, %v1252
    %v1259 = vadd.f32 %v1257, %v1258
    %v1260 = vtanh.pop %v1259
    %v1261 = vmul.f32 %v1256, %v1260
    %v1262 = vpack.c.bf16 %v1261, %v1261
    %v1263 = vld [vmem:[%s4] sm:$0xf]
    %v1264 = vld [vmem:[%s4 + $0x4] sm:$0xf]
    %v1265 = vld [vmem:[%s4 + $0x8] sm:$0xf]
    %v1266 = vld [vmem:[%s4 + $0xc] sm:$0xf]
    %v1267 = vld [vmem:[%s4 + $0x10] sm:$0xf]
    %v1268 = vld [vmem:[%s4 + $0x14] sm:$0xf]
    %v1269 = vld [vmem:[%s4 + $0x18] sm:$0xf]
    %v1270 = vld [vmem:[%s4 + $0x1c] sm:$0xf]
    %v1271 = vld [vmem:[%s4 + $0x20] sm:$0xf]
    %v1272 = vld [vmem:[%s4 + $0x24] sm:$0xf]
    %v1273 = vld [vmem:[%s4 + $0x28] sm:$0xf]
    %v1274 = vld [vmem:[%s4 + $0x2c] sm:$0xf]
    %v1275 = vld [vmem:[%s4 + $0x30] sm:$0xf]
    %v1276 = vld [vmem:[%s4 + $0x34] sm:$0xf]
    %v1277 = vld [vmem:[%s4 + $0x38] sm:$0xf]
    %v1278 = vld [vmem:[%s4 + $0x3c] sm:$0xf]
    %v1279 = vld [vmem:[%s5] sm:$0x1]
    %v1281 = vlaneseq
    %v1282 = vshrl.u32 %v1281, 7
    %v1283 = vsub.s32 0, %v1282
    %v1284 = vrot.slane %v1279, %v1283
    %v1302 = vunpack.c.l.b16 %v1263
    %v1303 = vunpack.c.l.b16 %v1264
    %v1304 = vunpack.c.l.b16 %v1265
    %v1305 = vunpack.c.l.b16 %v1266
    %v1306 = vunpack.c.l.b16 %v1267
    %v1307 = vunpack.c.l.b16 %v1268
    %v1308 = vunpack.c.l.b16 %v1269
    %v1309 = vunpack.c.l.b16 %v1270
    %v1310 = vunpack.c.l.b16 %v1271
    %v1311 = vunpack.c.l.b16 %v1272
    %v1312 = vunpack.c.l.b16 %v1273
    %v1313 = vunpack.c.l.b16 %v1274
    %v1314 = vunpack.c.l.b16 %v1275
    %v1315 = vunpack.c.l.b16 %v1276
    %v1316 = vunpack.c.l.b16 %v1277
    %v1317 = vunpack.c.l.b16 %v1278
    %v1318 = vpack.c.b16 %v1303, %v1302
    %v1319 = vpack.c.b16 %v1305, %v1304
    %v1320 = vpack.c.b16 %v1307, %v1306
    %v1321 = vpack.c.b16 %v1309, %v1308
    %v1322 = vpack.c.b16 %v1311, %v1310
    %v1323 = vpack.c.b16 %v1313, %v1312
    %v1324 = vpack.c.b16 %v1315, %v1314
    %v1325 = vpack.c.b16 %v1317, %v1316
    %1334 = vmatprep.subr.bf16.mxu0 0
    %1335 = vmatpush1.bf16.msra.mxu0 %v1318
    %1336 = vmatprep.subr.bf16.mxu0 0
    %1337 = vmatpush1.bf16.msra.mxu0 %v1319
    %1338 = vmatprep.subr.bf16.mxu0 0
    %1339 = vmatpush1.bf16.msra.mxu0 %v1320
    %1340 = vmatprep.subr.bf16.mxu0 0
    %1341 = vmatpush1.bf16.msra.mxu0 %v1321
    %1342 = vmatprep.subr.bf16.mxu0 0
    %1343 = vmatpush1.bf16.msra.mxu0 %v1322
    %1344 = vmatprep.subr.bf16.mxu0 0
    %1345 = vmatpush1.bf16.msra.mxu0 %v1323
    %1346 = vmatprep.subr.bf16.mxu0 0
    %1347 = vmatpush1.bf16.msra.mxu0 %v1324
    %1348 = vmatprep.subr.bf16.mxu0 0
    %1349 = vmatpush1.bf16.msra.mxu0 %v1325
    %1350 = vmatprep.subr.bf16.mxu0 0
    %1351 = vmatpush1.bf16.msra.mxu0 0
    %1352 = vmatprep.subr.bf16.mxu0 0
    %1353 = vmatpush1.bf16.msra.mxu0 0
    %1354 = vmatprep.subr.bf16.mxu0 0
    %1355 = vmatpush1.bf16.msra.mxu0 0
    %1356 = vmatprep.subr.bf16.mxu0 0
    %1357 = vmatpush1.bf16.msra.mxu0 0
    %1358 = vmatprep.subr.bf16.mxu0 0
    %1359 = vmatpush1.bf16.msra.mxu0 0
    %1360 = vmatprep.subr.bf16.mxu0 0
    %1361 = vmatpush1.bf16.msra.mxu0 0
    %1362 = vmatprep.subr.bf16.mxu0 0
    %1363 = vmatpush1.bf16.msra.mxu0 0
    %1364 = vmatprep.subr.bf16.mxu0 0
    %1365 = vmatpush1.bf16.msra.mxu0 0
    %1366 = vmatprep.mubr.bf16.mxu0 0
    %1367 = vmatmul.mubr.bf16.gmra.mrb[0].mxu0 %v1262
    %v1368 = vpop.f32.mrb[0].mxu0
    %v1369 = vadd.f32 %v1284, %v1368
    %v1370 = vpop.f32.mrb[0].mxu0
    %v1371 = vpop.f32.mrb[0].mxu0
    %v1372 = vpop.f32.mrb[0].mxu0
    %1373 = vdwg.mxu0
    %v1374 = vmax.f32 %v1369, 0.0
    %v1375 = vpack.c.bf16 %v1374, %v1374
    %v1376 = vld [vmem:[#allocation5] sm:$0xf]
    %v1377 = vld [vmem:[#allocation5 + $0x4] sm:$0xf]
    %v1378 = vld [vmem:[#allocation5 + $0x8] sm:$0xf]
    %v1379 = vld [vmem:[#allocation5 + $0xc] sm:$0xf]
    %v1380 = vld [vmem:[#allocation5 + $0x10] sm:$0xf]
    %v1381 = vld [vmem:[#allocation5 + $0x14] sm:$0xf]
    %v1382 = vld [vmem:[#allocation5 + $0x18] sm:$0xf]
    %v1383 = vld [vmem:[#allocation5 + $0x1c] sm:$0xf]
    %v1384 = vld [vmem:[#allocation5 + $0x20] sm:$0xf]
    %v1385 = vld [vmem:[#allocation5 + $0x24] sm:$0xf]
    %v1386 = vld [vmem:[#allocation5 + $0x28] sm:$0xf]
    %v1387 = vld [vmem:[#allocation5 + $0x2c] sm:$0xf]
    %v1388 = vld [vmem:[#allocation5 + $0x30] sm:$0xf]
    %v1389 = vld [vmem:[#allocation5 + $0x34] sm:$0xf]
    %v1390 = vld [vmem:[#allocation5 + $0x38] sm:$0xf]
    %v1391 = vld [vmem:[#allocation5 + $0x3c] sm:$0xf]
    %v1392 = vld [vmem:[%s7] sm:$0x1]
    %v1394 = vlaneseq
    %v1395 = vshrl.u32 %v1394, 7
    %v1396 = vsub.s32 0, %v1395
    %v1397 = vrot.slane %v1392, %v1396
    %v1415 = vunpack.c.l.b16 %v1376
    %v1416 = vunpack.c.l.b16 %v1377
    %v1417 = vunpack.c.l.b16 %v1378
    %v1418 = vunpack.c.l.b16 %v1379
    %v1419 = vunpack.c.l.b16 %v1380
    %v1420 = vunpack.c.l.b16 %v1381
    %v1421 = vunpack.c.l.b16 %v1382
    %v1422 = vunpack.c.l.b16 %v1383
    %v1423 = vunpack.c.l.b16 %v1384
    %v1424 = vunpack.c.l.b16 %v1385
    %v1425 = vunpack.c.l.b16 %v1386
    %v1426 = vunpack.c.l.b16 %v1387
    %v1427 = vunpack.c.l.b16 %v1388
    %v1428 = vunpack.c.l.b16 %v1389
    %v1429 = vunpack.c.l.b16 %v1390
    %v1430 = vunpack.c.l.b16 %v1391
    %v1431 = vpack.c.b16 %v1416, %v1415
    %v1432 = vpack.c.b16 %v1418, %v1417
    %v1433 = vpack.c.b16 %v1420, %v1419
    %v1434 = vpack.c.b16 %v1422, %v1421
    %v1435 = vpack.c.b16 %v1424, %v1423
    %v1436 = vpack.c.b16 %v1426, %v1425
    %v1437 = vpack.c.b16 %v1428, %v1427
    %v1438 = vpack.c.b16 %v1430, %v1429
    %1447 = vmatprep.subr.bf16.mxu0 0
    %1448 = vmatpush1.bf16.msra.mxu0 %v1431
    %1449 = vmatprep.subr.bf16.mxu0 0
    %1450 = vmatpush1.bf16.msra.mxu0 %v1432
    %1451 = vmatprep.subr.bf16.mxu0 0
    %1452 = vmatpush1.bf16.msra.mxu0 %v1433
    %1453 = vmatprep.subr.bf16.mxu0 0
    %1454 = vmatpush1.bf16.msra.mxu0 %v1434
    %1455 = vmatprep.subr.bf16.mxu0 0
    %1456 = vmatpush1.bf16.msra.mxu0 %v1435
    %1457 = vmatprep.subr.bf16.mxu0 0
    %1458 = vmatpush1.bf16.msra.mxu0 %v1436
    %1459 = vmatprep.subr.bf16.mxu0 0
    %1460 = vmatpush1.bf16.msra.mxu0 %v1437
    %1461 = vmatprep.subr.bf16.mxu0 0
    %1462 = vmatpush1.bf16.msra.mxu0 %v1438
    %1463 = vmatprep.subr.bf16.mxu0 0
    %1464 = vmatpush1.bf16.msra.mxu0 0
    %1465 = vmatprep.subr.bf16.mxu0 0
    %1466 = vmatpush1.bf16.msra.mxu0 0
    %1467 = vmatprep.subr.bf16.mxu0 0
    %1468 = vmatpush1.bf16.msra.mxu0 0
    %1469 = vmatprep.subr.bf16.mxu0 0
    %1470 = vmatpush1.bf16.msra.mxu0 0
    %1471 = vmatprep.subr.bf16.mxu0 0
    %1472 = vmatpush1.bf16.msra.mxu0 0
    %1473 = vmatprep.subr.bf16.mxu0 0
    %1474 = vmatpush1.bf16.msra.mxu0 0
    %1475 = vmatprep.subr.bf16.mxu0 0
    %1476 = vmatpush1.bf16.msra.mxu0 0
    %1477 = vmatprep.subr.bf16.mxu0 0
    %1478 = vmatpush1.bf16.msra.mxu0 0
    %1479 = vmatprep.mubr.bf16.mxu0 0
    %1480 = vmatmul.mubr.bf16.gmra.mrb[0].mxu0 %v1375
    %v1481 = vpop.f32.mrb[0].mxu0
    %v1482 = vadd.f32 %v1397, %v1481
    %v1483 = vpop.f32.mrb[0].mxu0
    %v1484 = vpop.f32.mrb[0].mxu0
    %v1485 = vpop.f32.mrb[0].mxu0
    %1486 = vdwg.mxu0
    %v1487 = vmax.f32 %v1482, 0.0
    %v1488 = vld [vmem:[%s8] sm:$0x1]
    %v1489 = vunpack.c.l.bf16 %v1488
    %v1490 = vlaneseq
    %v1491 = vshrl.u32 %v1490, 7
    %v1492 = vsub.s32 0, %v1491
    %v1493 = vrot.slane %v1489, %v1492
    %v1494 = vmul.f32 %v1487, %v1493
    %1495 = vadd.xlane.f32.xlu0 %v1494
    %v1496 = vpop.xlane.xlu0 %1495
    %v1497 = vld [vmem:[#allocation2] sm:$0x1]
    %v1499 = vlaneseq
    %v1500 = vshrl.u32 %v1499, 7
    %v1501 = vsub.s32 0, %v1500
    %v1502 = vrot.slane %v1497, %v1501
    %v1504 = vadd.f32 %v1496, %v1502
    %vm1505 = vcmask 7168
    %1506 = vst.msk [vmem:[%s10] sm:$0xff] %vm1505, %v1504
    // Predicated region
    $region50: #{tpu_custom_call.1} parent=1 // pred_check
      _
    $region51: #{tpu_custom_call.1} parent=1 // pred_check_branch
      %1508 = sbr.rel (0) target = $region53
    $region52: #{tpu_custom_call.1} parent=1 // pred_region
      _
    $region53: #{tpu_custom_call.1} parent=1 // pred_fallthru
      _
    // Predicated region
    $region54: #{tpu_custom_call.1} parent=1 // pred_check
      _
    $region55: #{tpu_custom_call.1} parent=1 // pred_check_branch
      %1510 = sbr.rel (0) target = $region57
    $region56: #{tpu_custom_call.1} parent=1 // pred_region
      _
    $region57: #{tpu_custom_call.1} parent=1 // pred_fallthru
      _
    %1511 = vsyncpa [#allocation4], 1
    %1512 = vsyncpa [#allocation6], 1

</llo_original>
